<compile_context>
chip_gen: v7x
topology: tpu7x:2x2x1
jax: 0.10.0
libtpu: 0.0.40
codegen_flags: <defaults>
</compile_context>

<pallas_src>
import math
from functools import partial, lru_cache

import jax
import jax.numpy as jnp
from jax import lax
from jax.experimental import pallas as pl
from jax.experimental.pallas import tpu as pltpu

BN_EPS = 1e-5
ACT_DTYPE = jnp.bfloat16
DCONV_WASTE_MAX = 0.3          # max fraction of junk output columns tolerated


def _round_up(x, m):
    return (x + m - 1) // m * m


def _pick_div(dim, cands, fallback):
    for c in cands:
        if dim % c == 0:
            return c
    return fallback


def _vmem_budget():
    """Generation-aware VMEM budgets (scoped limit, direct-conv guard)."""
    phys = None
    try:
        info = pltpu.get_tpu_info()
        phys = int(getattr(info, "vmem_capacity_bytes", 0)) or None
    except Exception:
        phys = None
    if phys is None:
        phys = 64 * 1024 * 1024                       # conservative (v7x per-core)
    if phys >= 100 * 1024 * 1024:                     # v5e / v6e: 128 MiB physical
        return 80 * 1024 * 1024, 60 * 1024 * 1024
    return 44 * 1024 * 1024, 28 * 1024 * 1024         # v7x: 64 MiB per core


VMEM_LIMIT, DCONV_VMEM_GUARD = _vmem_budget()


# ----------------------------------------------------------------------------
# Pallas kernel 1: fused (M,K)@(K,N) * scale + bias [+ residual] [+ ReLU]
# ----------------------------------------------------------------------------
def _mm_kernel(*refs, relu, has_res):
    if has_res:
        x_ref, w_ref, s_ref, b_ref, r_ref, o_ref, acc_ref = refs
    else:
        x_ref, w_ref, s_ref, b_ref, o_ref, acc_ref = refs
        r_ref = None

    @pl.when(pl.program_id(2) == 0)
    def _():
        acc_ref[...] = jnp.zeros_like(acc_ref)

    acc_ref[...] += jnp.dot(x_ref[...], w_ref[...],
                            preferred_element_type=jnp.float32)

    @pl.when(pl.program_id(2) == pl.num_programs(2) - 1)
    def _():
        y = acc_ref[...] * s_ref[...] + b_ref[...]
        if has_res:
            y = y + r_ref[...].astype(jnp.float32)
        if relu:
            y = jnp.maximum(y, 0.0)
        o_ref[...] = y.astype(o_ref.dtype)


@lru_cache(maxsize=None)
def _build_mm(Mp, Kp, Np, tm, tn, tk, relu, has_res, out_dtype):
    grid = (Mp // tm, Np // tn, Kp // tk)
    in_specs = [
        pl.BlockSpec((tm, tk), lambda i, j, k: (i, k)),
        pl.BlockSpec((tk, tn), lambda i, j, k: (k, j)),
        pl.BlockSpec((1, tn), lambda i, j, k: (0, j)),
        pl.BlockSpec((1, tn), lambda i, j, k: (0, j)),
    ]
    if has_res:
        in_specs.append(pl.BlockSpec((tm, tn), lambda i, j, k: (i, j)))
    return pl.pallas_call(
        partial(_mm_kernel, relu=relu, has_res=has_res),
        out_shape=jax.ShapeDtypeStruct((Mp, Np), out_dtype),
        grid_spec=pltpu.PrefetchScalarGridSpec(
            num_scalar_prefetch=0,
            grid=grid,
            in_specs=in_specs,
            out_specs=pl.BlockSpec((tm, tn), lambda i, j, k: (i, j)),
            scratch_shapes=[pltpu.VMEM((tm, tn), jnp.float32)],
        ),
        compiler_params=pltpu.CompilerParams(
            dimension_semantics=("parallel", "parallel", "arbitrary"),
            vmem_limit_bytes=VMEM_LIMIT),
    )


def matmul_bn_act(x, w, scale, bias, relu, residual=None, out_dtype=ACT_DTYPE):
    """(M,K)@(K,N)*scale[N]+bias[N] (+residual) (+ReLU) via one Pallas kernel."""
    M, K = x.shape
    K2, N = w.shape
    assert K == K2
    x = x.astype(jnp.bfloat16)
    w = w.astype(jnp.bfloat16)
    scale = scale.astype(jnp.float32).reshape(1, N)
    bias = bias.astype(jnp.float32).reshape(1, N)

    # tile choice: prefer tiles that divide exactly; small/ragged N is padded
    # to a 128-lane multiple so stores are full-width (no vst.msk).
    tm = _pick_div(M, (512, 256, 128, 64, 32, 16), 16)
    tn = _pick_div(N, (512, 256, 128), 128)
    tk = _pick_div(K, (1024, 512, 256, 128), K if K < 128 else 128)
    Mp, Np, Kp = _round_up(M, tm), _round_up(N, tn), _round_up(K, tk)

    if Mp > M or Kp > K:
        x = jnp.pad(x, ((0, Mp - M), (0, Kp - K)))
    if Kp > K or Np > N:
        w = jnp.pad(w, ((0, Kp - K), (0, Np - N)))
    if Np > N:
        scale = jnp.pad(scale, ((0, 0), (0, Np - N)))
        bias = jnp.pad(bias, ((0, 0), (0, Np - N)))
    args = [x, w, scale, bias]
    if residual is not None:
        r = residual.astype(jnp.bfloat16)
        if Mp > M or Np > N:
            r = jnp.pad(r, ((0, Mp - M), (0, Np - N)))
        args.append(r)

    out = _build_mm(Mp, Kp, Np, tm, tn, tk, bool(relu),
                    residual is not None, out_dtype)(*args)
    if Mp > M or Np > N:
        out = out[:M, :N]
    return out


# ----------------------------------------------------------------------------
# Pallas kernel 2: direct (im2col-free) KxK stride-1 "same" convolution
# ----------------------------------------------------------------------------
def _dconv_taps(x_ref, w_ref, KK, offs, m_out):
    acc = jnp.dot(x_ref[pl.ds(offs[0], m_out), :], w_ref[0],
                  preferred_element_type=jnp.float32)
    for t in range(1, KK):                      # static unrolled tap loop
        acc = acc + jnp.dot(x_ref[pl.ds(offs[t], m_out), :], w_ref[t],
                            preferred_element_type=jnp.float32)
    return acc


def _dconv_kernel_single(x_ref, w_ref, s_ref, b_ref, o_ref, *,
                         KK, offs, m_out, relu):
    # single reduction step: accumulate all KK taps locally, one store.
    acc = _dconv_taps(x_ref, w_ref, KK, offs, m_out)
    y = acc * s_ref[...] + b_ref[...]
    if relu:
        y = jnp.maximum(y, 0.0)
    o_ref[...] = y.astype(o_ref.dtype)


def _dconv_kernel_multi(x_ref, w_ref, s_ref, b_ref, o_ref, acc_ref, *,
                        KK, offs, m_out, relu):
    # accumulate the KK taps locally; touch the VMEM accumulator once per step
    acc = _dconv_taps(x_ref, w_ref, KK, offs, m_out)
    first = pl.program_id(2) == 0

    @pl.when(first)
    def _():
        acc_ref[...] = acc

    @pl.when(jnp.logical_not(first))
    def _():
        acc_ref[...] = acc_ref[...] + acc

    @pl.when(pl.program_id(2) == pl.num_programs(2) - 1)
    def _():
        y = acc_ref[...] * s_ref[...] + b_ref[...]
        if relu:
            y = jnp.maximum(y, 0.0)
        o_ref[...] = y.astype(o_ref.dtype)


@lru_cache(maxsize=None)
def _build_dconv(nb, S, C, Op, KK, m_out, tc, tn, offs, relu, out_dtype):
    nc = C // tc
    if nc == 1:
        grid = (nb, Op // tn)
        kern = partial(_dconv_kernel_single, KK=KK, offs=offs,
                       m_out=m_out, relu=relu)
        in_specs = [
            pl.BlockSpec((None, S, tc), lambda n, j: (n, 0, 0)),
            pl.BlockSpec((KK, tc, tn), lambda n, j: (0, 0, j)),
            pl.BlockSpec((1, tn), lambda n, j: (0, j)),
            pl.BlockSpec((1, tn), lambda n, j: (0, j)),
        ]
        out_spec = pl.BlockSpec((None, m_out, tn), lambda n, j: (n, 0, j))
        scratch = []
        dims = ("parallel", "parallel")
    else:
        grid = (nb, Op // tn, nc)          # reduction (in-channel) axis last
        kern = partial(_dconv_kernel_multi, KK=KK, offs=offs,
                       m_out=m_out, relu=relu)
        in_specs = [
            pl.BlockSpec((None, S, tc), lambda n, j, c: (n, 0, c)),
            pl.BlockSpec((KK, tc, tn), lambda n, j, c: (0, c, j)),
            pl.BlockSpec((1, tn), lambda n, j, c: (0, j)),
            pl.BlockSpec((1, tn), lambda n, j, c: (0, j)),
        ]
        out_spec = pl.BlockSpec((None, m_out, tn), lambda n, j, c: (n, 0, j))
        scratch = [pltpu.VMEM((m_out, tn), jnp.float32)]
        dims = ("parallel", "parallel", "arbitrary")
    return pl.pallas_call(
        kern,
        out_shape=jax.ShapeDtypeStruct((nb, m_out, Op), out_dtype),
        grid_spec=pltpu.PrefetchScalarGridSpec(
            num_scalar_prefetch=0,
            grid=grid,
            in_specs=in_specs,
            out_specs=out_spec,
            scratch_shapes=scratch,
        ),
        compiler_params=pltpu.CompilerParams(
            dimension_semantics=dims,
            vmem_limit_bytes=VMEM_LIMIT),
    )


def _dconv_plan(S, C, Op, KK, m_out):
    """Pick (tc, tn) for the direct conv: prefer one j-block (activation slab
    read once) and one c-step; shrink until the VMEM guard is met."""
    tc_cands = [c for c in (512, 256, 128) if C % c == 0] or [C]
    tn_cands = [n for n in (512, 256, 128) if Op % n == 0] or [Op]
    for tn in tn_cands:
        for tc in tc_cands:
            est = (2 * S * tc * 2              # double-buffered activation slab
                   + 2 * KK * tc * tn * 2      # double-buffered weight taps
                   + 2 * m_out * tn * 2        # double-buffered output tile
                   + 2 * m_out * tn * 4)       # f32 accumulator + live temp
            if est <= DCONV_VMEM_GUARD:
                return tc, tn
    return None


def _conv_direct(x, w_kio, K, O, scale, bias, dilation, relu, out_dtype):
    """Stride-1 'same' KxK conv without materialized im2col.

    The input is padded with (p, p+1) rows / (p, p) cols and flattened to
    (N, S, C).  Tap (kh,kw) becomes the constant offset kh*d*Wp + kw*d into
    the flattened image, so output rows oh*Wp+ow (ow < W) are exact; junk
    columns ow in [W, Wp) are computed and sliced away afterwards.
    """
    N, H, W, C = x.shape
    d = dilation
    p = d * (K - 1) // 2
    Wp = W + 2 * p
    if (Wp - W) / Wp > DCONV_WASTE_MAX:
        return None                       # too much junk work -> im2col fallback
    S = (H + 2 * p + 1) * Wp              # extra zero row keeps junk lanes in-bounds
    m_out = H * Wp
    Op = O if O % 128 == 0 else _round_up(O, 128)

    plan = _dconv_plan(S, C, Op, K * K, m_out)
    if plan is None:
        # TODO(synk): halo-tiled spatial blocking for very large feature maps
        # (v7x high-res); currently falls back to im2col instead.
        return None
    tc, tn = plan

    xp = jnp.pad(x, ((0, 0), (p, p + 1), (p, p), (0, 0))).reshape(N, S, C)
    wt = w_kio                                          # (KK, I, O) bf16, pre-prepped
    sc = scale.astype(jnp.float32).reshape(1, O)
    bi = bias.astype(jnp.float32).reshape(1, O)
    if Op > O:
        wt = jnp.pad(wt, ((0, 0), (0, 0), (0, Op - O)))
        sc = jnp.pad(sc, ((0, 0), (0, Op - O)))
        bi = jnp.pad(bi, ((0, 0), (0, Op - O)))
    offs = tuple(kh * d * Wp + kw * d for kh in range(K) for kw in range(K))

    call = _build_dconv(N, S, C, Op, K * K, m_out, tc, tn, offs,
                        bool(relu), out_dtype)
    out = call(xp, wt, sc, bi)
    return out.reshape(N, H, Wp, Op)[:, :, :W, :O]


# ----------------------------------------------------------------------------
# Conv wrapper (1x1 / direct / im2col fallback)
# ----------------------------------------------------------------------------
def _im2col(x, k, stride, dilation, padding):
    N, H, W, C = x.shape
    xp = jnp.pad(x, ((0, 0), (padding, padding), (padding, padding), (0, 0)))
    eff = dilation * (k - 1) + 1
    Ho = (H + 2 * padding - eff) // stride + 1
    Wo = (W + 2 * padding - eff) // stride + 1
    cols = []
    for kh in range(k):
        for kw in range(k):
            sl = xp[:,
                    kh * dilation: kh * dilation + stride * (Ho - 1) + 1: stride,
                    kw * dilation: kw * dilation + stride * (Wo - 1) + 1: stride,
                    :]
            cols.append(sl)
    patches = jnp.concatenate(cols, axis=-1).reshape(N * Ho * Wo, k * k * C)
    return patches, Ho, Wo


def conv2d(x, cw, scale=None, bias=None, stride=1, dilation=1, padding=0,
           relu=False, residual=None, out_dtype=ACT_DTYPE):
    """NHWC conv with pre-prepped weights, fused BN scale/bias (+res) + ReLU."""
    K, I, O = cw['k'], cw['i'], cw['o']
    w = cw['w']                                   # pre-cast bf16, matmul layout
    x = x.astype(jnp.bfloat16)
    if scale is None:
        scale = jnp.ones((O,), jnp.float32)
    if bias is None:
        bias = jnp.zeros((O,), jnp.float32)
    N = x.shape[0]

    if K == 1 and padding == 0:
        if stride != 1:
            x = x[:, ::stride, ::stride, :]
        _, Ho, Wo, C = x.shape
        patches = x.reshape(N * Ho * Wo, C)
        res2d = None if residual is None else residual.reshape(N * Ho * Wo, O)
        out = matmul_bn_act(patches, w, scale, bias, relu, res2d, out_dtype)
        return out.reshape(N, Ho, Wo, O)

    if (stride == 1 and K % 2 == 1 and
            padding == dilation * (K - 1) // 2 and residual is None):
        y = _conv_direct(x, w, K, O, scale, bias, dilation, relu, out_dtype)
        if y is not None:
            return y

    # fallback: 7x7 stride-2 stem, strided 3x3 convs, high-dilation ASPP/MG.
    # TODO(synk): direct strided 7x7 stem conv to avoid the 49x im2col expansion.
    patches, Ho, Wo = _im2col(x, K, stride, dilation, padding)
    wm = w.reshape(K * K * I, O)                  # (KK,I,O) -> im2col layout, no copy
    res2d = None if residual is None else residual.reshape(N * Ho * Wo, O)
    out = matmul_bn_act(patches, wm, scale, bias, relu, res2d, out_dtype)
    return out.reshape(N, Ho, Wo, O)


def bilinear_align_corners(x, out_h, out_w):
    """F.interpolate(..., mode='bilinear', align_corners=True) on NHWC."""
    N, H, W, C = x.shape

    def coords(out_size, in_size):
        if out_size == 1 or in_size == 1:
            return jnp.zeros((out_size,), jnp.float32)
        return jnp.arange(out_size, dtype=jnp.float32) * ((in_size - 1) / (out_size - 1))

    ys = coords(out_h, H)
    xs = coords(out_w, W)
    y0 = jnp.floor(ys).astype(jnp.int32)
    y1 = jnp.minimum(y0 + 1, H - 1)
    wy = (ys - y0.astype(jnp.float32))[None, :, None, None]
    x0 = jnp.floor(xs).astype(jnp.int32)
    x1 = jnp.minimum(x0 + 1, W - 1)
    wx = (xs - x0.astype(jnp.float32))[None, None, :, None]
    rows = x[:, y0] * (1.0 - wy) + x[:, y1] * wy
    out = rows[:, :, x0] * (1.0 - wx) + rows[:, :, x1] * wx
    return out.astype(x.dtype)


# ----------------------------------------------------------------------------
# Deterministic parameter initialization (weights pre-prepped once)
# ----------------------------------------------------------------------------
class _Keys:
    def __init__(self, seed):
        self._k = jax.random.PRNGKey(seed)

    def __call__(self):
        self._k, sub = jax.random.split(self._k)
        return sub


def _prep_conv(w_oihw):
    """One-time weight prep: fold into matmul layout + bf16 cast."""
    O, I, KH, KW = w_oihw.shape
    if KH == 1 and KW == 1:
        wm = jnp.transpose(w_oihw.reshape(O, I), (1, 0)).astype(jnp.bfloat16)   # (I,O)
    else:
        wm = jnp.transpose(w_oihw, (2, 3, 1, 0)).reshape(KH * KW, I, O)
        wm = wm.astype(jnp.bfloat16)                                            # (KK,I,O)
    return {'w': wm, 'k': KH, 'i': I, 'o': O}


def _conv(kg, out_c, in_c, k, fan='out'):
    n = k * k * (out_c if fan == 'out' else in_c)
    std = math.sqrt(2.0 / n)
    w = std * jax.random.normal(kg(), (out_c, in_c, k, k), jnp.float32)
    return _prep_conv(w)


def _bn(c):
    # eval-mode BN folded to per-channel scale/bias with default init stats
    scale = jnp.full((c,), 1.0 / math.sqrt(1.0 + BN_EPS), jnp.float32)
    bias = jnp.zeros((c,), jnp.float32)
    return scale, bias


def _make_bottleneck(kg, inplanes, planes, stride, dilation, downsample):
    p = dict(stride=stride, dilation=dilation)
    p['w1'], p['bn1'] = _conv(kg, planes, inplanes, 1), _bn(planes)
    p['w2'], p['bn2'] = _conv(kg, planes, planes, 3), _bn(planes)
    p['w3'], p['bn3'] = _conv(kg, planes * 4, planes, 1), _bn(planes * 4)
    if downsample:
        p['wd'], p['bnd'] = _conv(kg, planes * 4, inplanes, 1), _bn(planes * 4)
    else:
        p['wd'] = None
    return p


def init_resnet101(kg, output_stride=16):
    if output_stride == 16:
        strides, dilations = [1, 2, 2, 1], [1, 1, 1, 2]
    else:
        strides, dilations = [1, 2, 1, 1], [1, 1, 2, 4]
    mg_blocks = [1, 2, 4]
    params = {'conv1': _conv(kg, 64, 3, 7), 'bn1': _bn(64)}
    inplanes = 64

    def make_layer(planes, nblocks, stride, dilation):
        nonlocal inplanes
        layers = []
        ds = (stride != 1) or (inplanes != planes * 4)
        layers.append(_make_bottleneck(kg, inplanes, planes, stride, dilation, ds))
        inplanes = planes * 4
        for _ in range(1, nblocks):
            layers.append(_make_bottleneck(kg, inplanes, planes, 1, dilation, False))
        return layers

    def make_mg(planes, blocks, stride, dilation):
        nonlocal inplanes
        layers = []
        ds = (stride != 1) or (inplanes != planes * 4)
        layers.append(_make_bottleneck(kg, inplanes, planes, stride,
                                       blocks[0] * dilation, ds))
        inplanes = planes * 4
        for i in range(1, len(blocks)):
            layers.append(_make_bottleneck(kg, inplanes, planes, 1,
                                           blocks[i] * dilation, False))
        return layers

    params['layer1'] = make_layer(64, 3, strides[0], dilations[0])
    params['layer2'] = make_layer(128, 4, strides[1], dilations[1])
    params['layer3'] = make_layer(256, 23, strides[2], dilations[2])
    params['layer4'] = make_mg(512, mg_blocks, strides[3], dilations[3])
    return params


def init_aspp(kg, output_stride=16):
    inplanes = 2048
    d = [1, 6, 12, 18] if output_stride == 16 else [1, 12, 24, 36]
    p = {'dilations': d}
    p['a1w'], p['a1bn'] = _conv(kg, 256, inplanes, 1, 'in'), _bn(256)
    p['a2w'], p['a2bn'] = _conv(kg, 256, inplanes, 3, 'in'), _bn(256)
    p['a3w'], p['a3bn'] = _conv(kg, 256, inplanes, 3, 'in'), _bn(256)
    p['a4w'], p['a4bn'] = _conv(kg, 256, inplanes, 3, 'in'), _bn(256)
    p['gpw'], p['gpbn'] = _conv(kg, 256, inplanes, 1, 'in'), _bn(256)
    p['c1w'], p['c1bn'] = _conv(kg, 256, 1280, 1, 'in'), _bn(256)
    return p


def init_decoder(kg, num_classes):
    p = {}
    p['c1w'], p['c1bn'] = _conv(kg, 48, 256, 1, 'in'), _bn(48)
    p['lc1w'], p['lc1bn'] = _conv(kg, 256, 304, 3, 'in'), _bn(256)
    p['lc2w'], p['lc2bn'] = _conv(kg, 256, 256, 3, 'in'), _bn(256)
    p['lc3w'] = _conv(kg, num_classes, 256, 1, 'in')
    bound = 1.0 / math.sqrt(256)
    p['lc3b'] = jax.random.uniform(kg(), (num_classes,), jnp.float32, -bound, bound)
    return p


# ----------------------------------------------------------------------------
# Forward pass
# ----------------------------------------------------------------------------
def bottleneck_fwd(x, p):
    if p['wd'] is not None:
        res = conv2d(x, p['wd'], *p['bnd'], stride=p['stride'], relu=False)
    else:
        res = x
    out = conv2d(x, p['w1'], *p['bn1'], relu=True)
    out = conv2d(out, p['w2'], *p['bn2'], stride=p['stride'],
                 dilation=p['dilation'], padding=p['dilation'], relu=True)
    # conv3 + BN + residual add + ReLU fused into one Pallas matmul epilogue
    out = conv2d(out, p['w3'], *p['bn3'], relu=True, residual=res)
    return out


def resnet_fwd(x, p):
    x = conv2d(x, p['conv1'], *p['bn1'], stride=2, padding=3, relu=True)
    # MaxPool2d(kernel=3, stride=2, padding=1) -- exact in bf16, no f32 up-cast
    x = lax.reduce_window(x, jnp.asarray(-jnp.inf, x.dtype), lax.max,
                          (1, 3, 3, 1), (1, 2, 2, 1),
                          [(0, 0), (1, 1), (1, 1), (0, 0)])
    for bp in p['layer1']:
        x = bottleneck_fwd(x, bp)
    low_level_feat = x
    for bp in p['layer2']:
        x = bottleneck_fwd(x, bp)
    for bp in p['layer3']:
        x = bottleneck_fwd(x, bp)
    for bp in p['layer4']:
        x = bottleneck_fwd(x, bp)
    return x, low_level_feat


def aspp_fwd(x, p):
    d = p['dilations']
    x1 = conv2d(x, p['a1w'], *p['a1bn'], relu=True)
    x2 = conv2d(x, p['a2w'], *p['a2bn'], dilation=d[1], padding=d[1], relu=True)
    x3 = conv2d(x, p['a3w'], *p['a3bn'], dilation=d[2], padding=d[2], relu=True)
    x4 = conv2d(x, p['a4w'], *p['a4bn'], dilation=d[3], padding=d[3], relu=True)
    gap = jnp.mean(x.astype(jnp.float32), axis=(1, 2), keepdims=True)   # AdaptiveAvgPool2d((1,1))
    x5 = conv2d(gap, p['gpw'], *p['gpbn'], relu=True)
    x5 = bilinear_align_corners(x5, x4.shape[1], x4.shape[2]).astype(x4.dtype)
    xc = jnp.concatenate([x1, x2, x3, x4, x5], axis=-1)
    out = conv2d(xc, p['c1w'], *p['c1bn'], relu=True)
    # Dropout(0.5): eval-mode identity
    return out


def decoder_fwd(x, low, p):
    low = conv2d(low, p['c1w'], *p['c1bn'], relu=True)
    x = bilinear_align_corners(x, low.shape[1], low.shape[2]).astype(low.dtype)
    xc = jnp.concatenate([x, low], axis=-1)
    h = conv2d(xc, p['lc1w'], *p['lc1bn'], padding=1, relu=True)
    # Dropout(0.5): eval-mode identity
    h = conv2d(h, p['lc2w'], *p['lc2bn'], padding=1, relu=True)
    # Dropout(0.1): eval-mode identity
    out = conv2d(h, p['lc3w'], scale=None, bias=p['lc3b'], relu=False,
                 out_dtype=jnp.float32)
    return out


def deeplab_forward(params, x_nchw):
    x = jnp.transpose(x_nchw, (0, 2, 3, 1))                    # NCHW -> NHWC
    feat, low = resnet_fwd(x, params['backbone'])
    feat = aspp_fwd(feat, params['aspp'])
    out = decoder_fwd(feat, low, params['decoder'])
    out = bilinear_align_corners(out, x.shape[1], x.shape[2])
    return jnp.transpose(out, (0, 3, 1, 2))                    # NHWC -> NCHW


# ----------------------------------------------------------------------------
if __name__ == "__main__":
    kg = _Keys(42)
    params = {
        'backbone': init_resnet101(kg, output_stride=16),
        'aspp': init_aspp(kg, output_stride=16),
        'decoder': init_decoder(kg, num_classes=21),
    }
    x = jax.random.normal(jax.random.PRNGKey(0), (2, 3, 64, 64), jnp.float32)
    out = deeplab_forward(params, x)
    out = jax.block_until_ready(out)
    assert out.shape == (2, 21, 64, 64), out.shape
    assert bool(jnp.all(jnp.isfinite(out)))
    print("KERNEL_OK")
</pallas_src>

<mosaic_0001>
module attributes {stable_mosaic.version = 11 : i64} {
  func.func @_mm_kernel(%arg0: i32, %arg1: i32, %arg2: i32, %arg3: memref<512x128xbf16, #tpu.memory_space<vmem>>, %arg4: memref<128x128xbf16, #tpu.memory_space<vmem>>, %arg5: memref<1x128xf32, #tpu.memory_space<vmem>>, %arg6: memref<1x128xf32, #tpu.memory_space<vmem>>, %arg7: memref<512x128xbf16, #tpu.memory_space<vmem>>, %arg8: memref<512x128xf32, #tpu.memory_space<vmem>>) attributes {dimension_semantics = [#tpu.dimension_semantics<parallel>, #tpu.dimension_semantics<parallel>, #tpu.dimension_semantics<arbitrary>], iteration_bounds = array<i64: 4, 1, 2>, scalar_prefetch = 0 : i64, scratch_operands = 1 : i64, tpu.core_type = #tpu.core_type<tc>, window_params = [{transform_indices = @transform_0, window_bounds = array<i64: 512, 128>}, {transform_indices = @transform_1, window_bounds = array<i64: 128, 128>}, {transform_indices = @transform_2, window_bounds = array<i64: 1, 128>}, {transform_indices = @transform_3, window_bounds = array<i64: 1, 128>}, {transform_indices = @transform_4, window_bounds = array<i64: 512, 128>}]} {
    %c0_i32 = arith.constant 0 : i32
    %0 = arith.cmpi eq, %arg2, %c0_i32 : i32
    %1 = arith.extui %0 : i1 to i32
    %c0_i32_0 = arith.constant 0 : i32
    %2 = arith.cmpi ne, %1, %c0_i32_0 : i32
    scf.if %2 {
      %cst_9 = arith.constant 0.000000e+00 : f32
      %12 = vector.broadcast %cst_9 : f32 to vector<512x128xf32>
      %c0_10 = arith.constant 0 : index
      %c0_11 = arith.constant 0 : index
      %13 = vector.load %arg8[%c0_10, %c0_11] : memref<512x128xf32, #tpu.memory_space<vmem>>, vector<512x128xf32>
      tpu.vector_store %arg8[%c0_10, %c0_11], %12 {strides = array<i32>} : memref<512x128xf32, #tpu.memory_space<vmem>>, vector<512x128xf32>,
    } else {
    }
    %c0 = arith.constant 0 : index
    %c0_1 = arith.constant 0 : index
    %3 = vector.load %arg8[%c0, %c0_1] : memref<512x128xf32, #tpu.memory_space<vmem>>, vector<512x128xf32>
    %c0_2 = arith.constant 0 : index
    %c0_3 = arith.constant 0 : index
    %4 = vector.load %arg3[%c0_2, %c0_3] : memref<512x128xbf16, #tpu.memory_space<vmem>>, vector<512x128xbf16>
    %c0_4 = arith.constant 0 : index
    %c0_5 = arith.constant 0 : index
    %5 = vector.load %arg4[%c0_4, %c0_5] : memref<128x128xbf16, #tpu.memory_space<vmem>>, vector<128x128xbf16>
    %cst = arith.constant dense<0.000000e+00> : vector<512x128xf32>
    %6 = tpu.matmul %4, %5, %cst {dimension_numbers = #tpu.dot_dimension_numbers<[1], [0], [0], [1], [0, 0, 1, 1], [], []>} : vector<512x128xbf16>, vector<128x128xbf16>, vector<512x128xf32> -> vector<512x128xf32>
    %7 = arith.addf %3, %6 : vector<512x128xf32>
    %c0_6 = arith.constant 0 : index
    %c0_7 = arith.constant 0 : index
    %8 = vector.load %arg8[%c0_6, %c0_7] : memref<512x128xf32, #tpu.memory_space<vmem>>, vector<512x128xf32>
    tpu.vector_store %arg8[%c0_6, %c0_7], %7 {strides = array<i32>} : memref<512x128xf32, #tpu.memory_space<vmem>>, vector<512x128xf32>,
    %c1_i32 = arith.constant 1 : i32
    %9 = arith.cmpi eq, %arg2, %c1_i32 : i32
    %10 = arith.extui %9 : i1 to i32
    %c0_i32_8 = arith.constant 0 : i32
    %11 = arith.cmpi ne, %10, %c0_i32_8 : i32
    scf.if %11 {
      %c0_9 = arith.constant 0 : index
      %c0_10 = arith.constant 0 : index
      %12 = vector.load %arg8[%c0_9, %c0_10] : memref<512x128xf32, #tpu.memory_space<vmem>>, vector<512x128xf32>
      %c0_11 = arith.constant 0 : index
      %c0_12 = arith.constant 0 : index
      %13 = vector.load %arg5[%c0_11, %c0_12] : memref<1x128xf32, #tpu.memory_space<vmem>>, vector<1x128xf32>
      %14 = vector.broadcast %13 : vector<1x128xf32> to vector<512x128xf32>
      %15 = arith.mulf %12, %14 : vector<512x128xf32>
      %c0_13 = arith.constant 0 : index
      %c0_14 = arith.constant 0 : index
      %16 = vector.load %arg6[%c0_13, %c0_14] : memref<1x128xf32, #tpu.memory_space<vmem>>, vector<1x128xf32>
      %17 = vector.broadcast %16 : vector<1x128xf32> to vector<512x128xf32>
      %18 = arith.addf %15, %17 : vector<512x128xf32>
      %cst_15 = arith.constant 0.000000e+00 : f32
      %19 = vector.broadcast %cst_15 : f32 to vector<512x128xf32>
      %20 = arith.maximumf %18, %19 : vector<512x128xf32>
      %21 = arith.truncf %20 : vector<512x128xf32> to vector<512x128xbf16>
      %c0_16 = arith.constant 0 : index
      %c0_17 = arith.constant 0 : index
      %22 = vector.load %arg7[%c0_16, %c0_17] : memref<512x128xbf16, #tpu.memory_space<vmem>>, vector<512x128xbf16>
      tpu.vector_store %arg7[%c0_16, %c0_17], %21 {strides = array<i32>} : memref<512x128xbf16, #tpu.memory_space<vmem>>, vector<512x128xbf16>,
    } else {
    }
    return
  }
  func.func @transform_0(%arg0: i32, %arg1: i32, %arg2: i32) -> (i32, i32) {
    %c0_i32 = arith.constant 0 : i32
    return %arg0, %arg2 : i32, i32
  }
  func.func @transform_1(%arg0: i32, %arg1: i32, %arg2: i32) -> (i32, i32) {
    %c0_i32 = arith.constant 0 : i32
    return %arg2, %arg1 : i32, i32
  }
  func.func @transform_2(%arg0: i32, %arg1: i32, %arg2: i32) -> (i32, i32) {
    %c0_i32 = arith.constant 0 : i32
    %c0_i32_0 = arith.constant 0 : i32
    return %c0_i32, %arg1 : i32, i32
  }
  func.func @transform_3(%arg0: i32, %arg1: i32, %arg2: i32) -> (i32, i32) {
    %c0_i32 = arith.constant 0 : i32
    %c0_i32_0 = arith.constant 0 : i32
    return %c0_i32, %arg1 : i32, i32
  }
  func.func @transform_4(%arg0: i32, %arg1: i32, %arg2: i32) -> (i32, i32) {
    %c0_i32 = arith.constant 0 : i32
    return %arg0, %arg1 : i32, i32
  }
}

</mosaic_0001>

<llo_original>
// kernel: tpu_custom_call.1
$region0: #{tpu_custom_call.1}
  #allocation0 [shape = 'u32[]', space=smem, size = 0x4, offset = 0x4, fixed_abs, tag = 'smem constant byte address 0x4 - core index']
  #allocation1 [shape = 'u32[144,128]{1,0:T(1,128)}', space=vmem, size = 0x12000, scoped, tag = 'internal scratch']
  #allocation2 [shape = 'f32[512,128]{1,0:T(8,128)}', space=vmem, size = 0x40000, scoped, tag = 'scratch operand']
  %s0 = inlined_call_operand.hbm [shape: bf16[2048,256], index: 0, kind: input, shape index: {}]
  %s1 = inlined_call_operand.hbm [shape: bf16[256,128], index: 1, kind: input, shape index: {}]
  %s2 = inlined_call_operand.vmem [shape: f32[1,128], index: 2, kind: input, shape index: {}]
  %s3 = inlined_call_operand.vmem [shape: f32[1,128], index: 3, kind: input, shape index: {}]
  %s4 = inlined_call_operand.hbm [shape: bf16[2048,128], index: 4, kind: output, shape index: {}]
  %s5 = sld [smem:[#allocation0]]
  $region65: #{tpu_custom_call.1} parent=0
    _
  %s7 = ssub.s32 1, %s5
  %s8 = scalar_select 0, %s7, %s5
  $region1: #{tpu_custom_call.1} parent=0
    #allocation3 [shape = 'u8[262144]{0}', space=vmem, size = 0x40000, scoped, tag = 'input window, operand 0']
    #allocation4 [shape = 's32[2]{0}', space=sflag, size = 0x8, scoped, tag = 'scoped memory for tpu_custom_call.1']
    #allocation5 [shape = 's32[2]{0}', space=sflag, size = 0x8, scoped, tag = 'scoped memory for tpu_custom_call.1']
    #allocation6 [shape = 'u8[65536]{0}', space=vmem, size = 0x10000, scoped, tag = 'input window, operand 1']
    #allocation7 [shape = 's32[2]{0}', space=sflag, size = 0x8, scoped, tag = 'scoped memory for tpu_custom_call.1']
    #allocation8 [shape = 'u8[262144]{0}', space=vmem, size = 0x40000, scoped, tag = 'output window, operand 0']
    %9 = vsyncpa [#allocation4], 0
    %s10 = scalar_lea.sflag [#allocation4], 1
    %11 = vsyncpa %s10, 0
    %12 = vsyncpa [#allocation7], 0
    %s13 = scalar_lea.sflag [#allocation7], 1
    %14 = vsyncpa %s13, 0
    %15 = vsyncpa [#allocation5], 0
    %s16 = scalar_lea.sflag [#allocation5], 1
    %17 = vsyncpa %s16, 0
    loop: start=0, step=1, limit=10
    $region2: #{tpu_custom_call.1} parent=1 // loop_pre_header
      _
    $region3: #{tpu_custom_call.1} parent=1 // loop_header
      %s19 = sphi 0, %s23
      %p20 = scmp.ge.s32.totalorder %s19, 10
      %s26 = sphi 0, %s45
      %s27 = sphi 0, %s41
      %s28 = sphi 0, %s37
      %s29 = sphi 0, %s26
      %s30 = sphi 0, %s27
      %s31 = sphi 0, %s28
      %s32 = sphi 0, %s29
      %s33 = sphi 0, %s30
      %s34 = sphi 0, %s31
      %s50 = sphi 0, %s52
      %s53 = sphi 0, %s50
      %s54 = sphi 0, %s53
      %s70 = sphi 0, %s54
      %s78 = sphi 0, %s80
      %s81 = sphi 0, %s78
      %s82 = sphi 0, %s81
      %s98 = sphi 0, %s82
      %s104 = sphi 0, %s106
      %s107 = sphi 0, %s104
      %s108 = sphi 0, %s107
      %s124 = sphi 0, %s108
      %s130 = sphi 0, %s132
      %s133 = sphi 0, %s130
      %s134 = sphi 0, %s133
      %s150 = sphi 0, %s134
      %s158 = sphi 0, %s160
      %s161 = sphi 0, %s158
      %s162 = sphi 0, %s161
      %s178 = sphi 0, %s162
    $region4: #{tpu_custom_call.1} parent=1 // loop_header_branch
      %22 = sbr.rel (%p20) target = $region8
    $region5: #{tpu_custom_call.1} parent=1 // loop_body
      %s24 = ssub.s32 %s19, 1
      %s25 = ssub.s32 %s19, 2
      %s35 = sadd.s32 1, %s28
      %p36 = scmp.ge.s32.totalorder %s35, 2
      %s37 = scalar_select %p36, 0, %s35
      %s38 = sadd.s32 1, %s27
      %s39 = scalar_select %p36, %s38, %s27
      %p40 = scmp.ge.s32.totalorder %s39, 1
      %s41 = scalar_select %p40, 0, %s39
      %s42 = sadd.s32 1, %s26
      %s43 = scalar_select %p40, %s42, %s26
      %p44 = scmp.ge.s32.totalorder %s43, 4
      %s45 = scalar_select %p44, 0, %s43
      %s46 = ssub.s32 %s26, %s45
      %s47 = ssub.s32 %s28, %s37
      %s48 = sor.u32 %s46, %s47
      %p49 = scmp.eq.s32.totalorder %s48, 0
      %s51 = sadd.s32 %s50, 1
      %s52 = scalar_select %p49, %s50, %s51
      %p55 = pneg %p49
      %p56 = scmp.eq.s32.totalorder %s19, 7
      %p57 = por %p55, %p56
      %p58 = scmp.ne.s32.totalorder %s50, %s53
      %p59 = scmp.eq.s32.totalorder %s19, 0
      %p60 = por %p58, %p59
      %p61 = scmp.ne.s32.totalorder %s50, %s53
      %p62 = scmp.eq.s32.totalorder %s24, 7
      %p63 = por %p61, %p62
      %p64 = scmp.ne.s32.totalorder %s53, %s54
      %p65 = scmp.eq.s32.totalorder %s24, 0
      %p66 = por %p64, %p65
      %p67 = scmp.ne.s32.totalorder %s53, %s54
      %p68 = scmp.eq.s32.totalorder %s25, 7
      %p69 = por %p67, %p68
      %p71 = scmp.ne.s32.totalorder %s54, %s70
      %p72 = scmp.eq.s32.totalorder %s25, 0
      %p73 = por %p71, %p72
      %s74 = ssub.s32 %s28, %s37
      %s75 = ssub.s32 %s27, %s41
      %s76 = sor.u32 %s74, %s75
      %p77 = scmp.eq.s32.totalorder %s76, 0
      %s79 = sadd.s32 %s78, 1
      %s80 = scalar_select %p77, %s78, %s79
      %p83 = pneg %p77
      %p84 = scmp.eq.s32.totalorder %s19, 7
      %p85 = por %p83, %p84
      %p86 = scmp.ne.s32.totalorder %s78, %s81
      %p87 = scmp.eq.s32.totalorder %s19, 0
      %p88 = por %p86, %p87
      %p89 = scmp.ne.s32.totalorder %s78, %s81
      %p90 = scmp.eq.s32.totalorder %s24, 7
      %p91 = por %p89, %p90
      %p92 = scmp.ne.s32.totalorder %s81, %s82
      %p93 = scmp.eq.s32.totalorder %s24, 0
      %p94 = por %p92, %p93
      %p95 = scmp.ne.s32.totalorder %s81, %s82
      %p96 = scmp.eq.s32.totalorder %s25, 7
      %p97 = por %p95, %p96
      %p99 = scmp.ne.s32.totalorder %s82, %s98
      %p100 = scmp.eq.s32.totalorder %s25, 0
      %p101 = por %p99, %p100
      %s102 = ssub.s32 %s27, %s41
      %p103 = scmp.eq.s32.totalorder %s102, 0
      %s105 = sadd.s32 %s104, 1
      %s106 = scalar_select %p103, %s104, %s105
      %p109 = pneg %p103
      %p110 = scmp.eq.s32.totalorder %s19, 7
      %p111 = por %p109, %p110
      %p112 = scmp.ne.s32.totalorder %s104, %s107
      %p113 = scmp.eq.s32.totalorder %s19, 0
      %p114 = por %p112, %p113
      %p115 = scmp.ne.s32.totalorder %s104, %s107
      %p116 = scmp.eq.s32.totalorder %s24, 7
      %p117 = por %p115, %p116
      %p118 = scmp.ne.s32.totalorder %s107, %s108
      %p119 = scmp.eq.s32.totalorder %s24, 0
      %p120 = por %p118, %p119
      %p121 = scmp.ne.s32.totalorder %s107, %s108
      %p122 = scmp.eq.s32.totalorder %s25, 7
      %p123 = por %p121, %p122
      %p125 = scmp.ne.s32.totalorder %s108, %s124
      %p126 = scmp.eq.s32.totalorder %s25, 0
      %p127 = por %p125, %p126
      %s128 = ssub.s32 %s27, %s41
      %p129 = scmp.eq.s32.totalorder %s128, 0
      %s131 = sadd.s32 %s130, 1
      %s132 = scalar_select %p129, %s130, %s131
      %p135 = pneg %p129
      %p136 = scmp.eq.s32.totalorder %s19, 7
      %p137 = por %p135, %p136
      %p138 = scmp.ne.s32.totalorder %s130, %s133
      %p139 = scmp.eq.s32.totalorder %s19, 0
      %p140 = por %p138, %p139
      %p141 = scmp.ne.s32.totalorder %s130, %s133
      %p142 = scmp.eq.s32.totalorder %s24, 7
      %p143 = por %p141, %p142
      %p144 = scmp.ne.s32.totalorder %s133, %s134
      %p145 = scmp.eq.s32.totalorder %s24, 0
      %p146 = por %p144, %p145
      %p147 = scmp.ne.s32.totalorder %s133, %s134
      %p148 = scmp.eq.s32.totalorder %s25, 7
      %p149 = por %p147, %p148
      %p151 = scmp.ne.s32.totalorder %s134, %s150
      %p152 = scmp.eq.s32.totalorder %s25, 0
      %p153 = por %p151, %p152
      %s154 = ssub.s32 %s26, %s45
      %s155 = ssub.s32 %s27, %s41
      %s156 = sor.u32 %s154, %s155
      %p157 = scmp.eq.s32.totalorder %s156, 0
      %s159 = sadd.s32 %s158, 1
      %s160 = scalar_select %p157, %s158, %s159
      %p163 = pneg %p157
      %p164 = scmp.eq.s32.totalorder %s19, 7
      %p165 = por %p163, %p164
      %p166 = scmp.ne.s32.totalorder %s158, %s161
      %p167 = scmp.eq.s32.totalorder %s19, 0
      %p168 = por %p166, %p167
      %p169 = scmp.ne.s32.totalorder %s158, %s161
      %p170 = scmp.eq.s32.totalorder %s24, 7
      %p171 = por %p169, %p170
      %p172 = scmp.ne.s32.totalorder %s161, %s162
      %p173 = scmp.eq.s32.totalorder %s24, 0
      %p174 = por %p172, %p173
      %p175 = scmp.ne.s32.totalorder %s161, %s162
      %p176 = scmp.eq.s32.totalorder %s25, 7
      %p177 = por %p175, %p176
      %p179 = scmp.ne.s32.totalorder %s162, %s178
      %p180 = scmp.eq.s32.totalorder %s25, 0
      %p181 = por %p179, %p180
      %p182 = scmp.le.s32.totalorder 1, %s19
      %p183 = scmp.lt.s32.totalorder %s19, 9
      %p184 = pnand %p182, %p183
      %p185 = pneg %p184
      // Predicated region
      $region9: #{tpu_custom_call.1} parent=5 // pred_check
        _
      $region10: #{tpu_custom_call.1} parent=5 // pred_check_branch
        %187 = sbr.rel (%p184) target = $region12
      $region11: #{tpu_custom_call.1} parent=5 // pred_region
        %s188 = ssub.s32 %s19, 1
        // Predicated region
        $region13: #{tpu_custom_call.1} parent=11 // pred_check
          %p189 = pneg %p120
        $region14: #{tpu_custom_call.1} parent=11 // pred_check_branch
          %191 = sbr.rel (%p189) target = $region16
        $region15: #{tpu_custom_call.1} parent=11 // pred_region
          %p192 = scmp.lt.s32.totalorder %s30, 0
          %s193 = scalar_select %p192, %s30, 0
          %s194 = scalar_lea.vmem %s2, %s193
        $region16: #{tpu_custom_call.1} parent=11 // pred_fallthru
          _
        // Predicated region
        $region17: #{tpu_custom_call.1} parent=11 // pred_check
          %p195 = pneg %p146
        $region18: #{tpu_custom_call.1} parent=11 // pred_check_branch
          %197 = sbr.rel (%p195) target = $region20
        $region19: #{tpu_custom_call.1} parent=11 // pred_region
          %p198 = scmp.lt.s32.totalorder %s30, 0
          %s199 = scalar_select %p198, %s30, 0
          %s200 = scalar_lea.vmem %s3, %s199
        $region20: #{tpu_custom_call.1} parent=11 // pred_fallthru
          _
      $region12: #{tpu_custom_call.1} parent=5 // pred_fallthru
        _
      %p201 = scmp.lt.s32.totalorder %s19, 8
      // Predicated region
      $region21: #{tpu_custom_call.1} parent=5 // pred_check
        %p202 = pneg %p201
      $region22: #{tpu_custom_call.1} parent=5 // pred_check_branch
        %204 = sbr.rel (%p202) target = $region24
      $region23: #{tpu_custom_call.1} parent=5 // pred_region
        // Predicated region
        $region25: #{tpu_custom_call.1} parent=23 // pred_check
          %p205 = pneg %p60
        $region26: #{tpu_custom_call.1} parent=23 // pred_check_branch
          %207 = sbr.rel (%p205) target = $region28
        $region27: #{tpu_custom_call.1} parent=23 // pred_region
          %s208 = sand.u32 %s50, 1
          %s209 = scalar_lea.sflag [#allocation4], %s208
          %s210 = sand.u32 %s50, 1
          %s211 = smul.addr %s210, 256
          %s212 = scalar_lea.vmem [#allocation3], %s211
          %s213 = smul.u32 64, %s26
          %s215 = ssub.s32 4096, 4096
          %216 = vsyncadd %s209, %s215
          %s217 = smul.addr %s213, 2
          %s218 = sadd.s32 %s28, %s217
          %s219 = smul.addr %s218, 64
          %s220 = scalar_lea.hbm %s0, %s219
          %s221 = sshll.u32 %s212, 4
          %s222 = int_to_ptr.vmem [resolvable:$true] %s221
          %227 = dma.hbm_to_vmem [thread:$0]  %s220, 4096, %s222, %s209, 128, 64, 4
        $region28: #{tpu_custom_call.1} parent=23 // pred_fallthru
          _
        // Predicated region
        $region29: #{tpu_custom_call.1} parent=23 // pred_check
          %p228 = pneg %p88
        $region30: #{tpu_custom_call.1} parent=23 // pred_check_branch
          %230 = sbr.rel (%p228) target = $region32
        $region31: #{tpu_custom_call.1} parent=23 // pred_region
          %s231 = sand.u32 %s78, 1
          %s232 = scalar_lea.sflag [#allocation7], %s231
          %s233 = sand.u32 %s78, 1
          %s234 = smul.addr %s233, 64
          %s235 = scalar_lea.vmem [#allocation6], %s234
          %s236 = smul.u32 16, %s28
          %s238 = ssub.s32 1024, 1024
          %239 = vsyncadd %s232, %s238
          %s240 = sadd.s32 %s27, %s236
          %s241 = smul.addr %s240, 64
          %s242 = scalar_lea.hbm %s1, %s241
          %s243 = sshll.u32 %s235, 4
          %s244 = int_to_ptr.vmem [resolvable:$true] %s243
          %249 = dma.hbm_to_vmem [thread:$0]  %s242, 1024, %s244, %s232, 64, 64, 4
        $region32: #{tpu_custom_call.1} parent=23 // pred_fallthru
          _
      $region24: #{tpu_custom_call.1} parent=5 // pred_fallthru
        _
      %p250 = scmp.le.s32.totalorder 1, %s19
      %p251 = scmp.lt.s32.totalorder %s19, 9
      %p252 = pnand %p250, %p251
      %p253 = pneg %p252
      // Predicated region
      $region33: #{tpu_custom_call.1} parent=5 // pred_check
        _
      $region34: #{tpu_custom_call.1} parent=5 // pred_check_branch
        %255 = sbr.rel (%p252) target = $region36
      $region35: #{tpu_custom_call.1} parent=5 // pred_region
        %s256 = ssub.s32 %s19, 1
        %s257 = sand.u32 %s53, 1
        %s258 = scalar_lea.sflag [#allocation4], %s257
        %s259 = sand.u32 %s53, 1
        %s260 = smul.addr %s259, 256
        %s261 = scalar_lea.vmem [#allocation3], %s260
        // Predicated region
        $region37: #{tpu_custom_call.1} parent=35 // pred_check
          %p262 = pneg %p66
        $region38: #{tpu_custom_call.1} parent=35 // pred_check_branch
          %264 = sbr.rel (%p262) target = $region40
        $region39: #{tpu_custom_call.1} parent=35 // pred_region
          %265 = dma.done %s258, 4096
        $region40: #{tpu_custom_call.1} parent=35 // pred_fallthru
          _
        %s266 = sand.u32 %s81, 1
        %s267 = scalar_lea.sflag [#allocation7], %s266
        %s268 = sand.u32 %s81, 1
        %s269 = smul.addr %s268, 64
        %s270 = scalar_lea.vmem [#allocation6], %s269
        // Predicated region
        $region41: #{tpu_custom_call.1} parent=35 // pred_check
          %p271 = pneg %p94
        $region42: #{tpu_custom_call.1} parent=35 // pred_check_branch
          %273 = sbr.rel (%p271) target = $region44
        $region43: #{tpu_custom_call.1} parent=35 // pred_region
          %274 = dma.done %s267, 1024
        $region44: #{tpu_custom_call.1} parent=35 // pred_fallthru
          _
        %s275 = sand.u32 %s53, 1
        %s276 = scalar_lea.sflag [#allocation4], %s275
        %s277 = sand.u32 %s53, 1
        %s278 = smul.addr %s277, 256
        %s279 = scalar_lea.vmem [#allocation3], %s278
        %p280 = pneg %p66
        %p281 = pneg %p63
        %s282 = sand.u32 %s81, 1
        %s283 = scalar_lea.sflag [#allocation7], %s282
        %s284 = sand.u32 %s81, 1
        %s285 = smul.addr %s284, 64
        %s286 = scalar_lea.vmem [#allocation6], %s285
        %p287 = pneg %p94
        %p288 = pneg %p91
        %p289 = scmp.lt.s32.totalorder %s30, 0
        %s290 = scalar_select %p289, %s30, 0
        %s291 = scalar_lea.vmem %s2, %s290
        %p292 = pneg %p120
        %p293 = pneg %p117
        %p294 = scmp.lt.s32.totalorder %s30, 0
        %s295 = scalar_select %p294, %s30, 0
        %s296 = scalar_lea.vmem %s3, %s295
        %p297 = pneg %p146
        %p298 = pneg %p143
        %p299 = pneg %p174
        %p300 = pneg %p171
        %s301 = sand.u32 %s161, 1
        %s302 = scalar_lea.sflag [#allocation5], %s301
        %s303 = sand.u32 %s161, 1
        %s304 = smul.addr %s303, 256
        %s305 = scalar_lea.vmem [#allocation8], %s304
        %s306 = smul.u32 64, %s29
        %s307 = smul.u32 16, %s31
        %p308 = scmp.lt.s32.totalorder %s30, 0
        %s309 = scalar_select %p308, %s30, 0
        %s310 = scalar_lea.vmem %s2, %s309
        %p311 = scmp.lt.s32.totalorder %s30, 0
        %s312 = scalar_select %p311, %s30, 0
        %s313 = scalar_lea.vmem %s3, %s312
        %s314 = smul.u32 64, %s29
        %p316 = scmp.eq.s32.totalorder %s31, 0
        // Predicated region
        $region45: #{tpu_custom_call.1} parent=35 // pred_check
          %p317 = pneg %p316
        $region46: #{tpu_custom_call.1} parent=35 // pred_check_branch
          %319 = sbr.rel (%p317) target = $region48
        $region47: #{tpu_custom_call.1} parent=35 // pred_region
          %320 = vst [vmem:[#allocation2] sm:$0xff] 0.0
          %321 = vst [vmem:[#allocation2 + $0x8] sm:$0xff] 0.0
          %322 = vst [vmem:[#allocation2 + $0x10] sm:$0xff] 0.0
          %323 = vst [vmem:[#allocation2 + $0x18] sm:$0xff] 0.0
          %324 = vst [vmem:[#allocation2 + $0x20] sm:$0xff] 0.0
          %325 = vst [vmem:[#allocation2 + $0x28] sm:$0xff] 0.0
          %326 = vst [vmem:[#allocation2 + $0x30] sm:$0xff] 0.0
          %327 = vst [vmem:[#allocation2 + $0x38] sm:$0xff] 0.0
          %328 = vst [vmem:[#allocation2 + $0x40] sm:$0xff] 0.0
          %329 = vst [vmem:[#allocation2 + $0x48] sm:$0xff] 0.0
          %330 = vst [vmem:[#allocation2 + $0x50] sm:$0xff] 0.0
          %331 = vst [vmem:[#allocation2 + $0x58] sm:$0xff] 0.0
          %332 = vst [vmem:[#allocation2 + $0x60] sm:$0xff] 0.0
          %333 = vst [vmem:[#allocation2 + $0x68] sm:$0xff] 0.0
          %334 = vst [vmem:[#allocation2 + $0x70] sm:$0xff] 0.0
          %335 = vst [vmem:[#allocation2 + $0x78] sm:$0xff] 0.0
          %336 = vst [vmem:[#allocation2 + $0x80] sm:$0xff] 0.0
          %337 = vst [vmem:[#allocation2 + $0x88] sm:$0xff] 0.0
          %338 = vst [vmem:[#allocation2 + $0x90] sm:$0xff] 0.0
          %339 = vst [vmem:[#allocation2 + $0x98] sm:$0xff] 0.0
          %340 = vst [vmem:[#allocation2 + $0xa0] sm:$0xff] 0.0
          %341 = vst [vmem:[#allocation2 + $0xa8] sm:$0xff] 0.0
          %342 = vst [vmem:[#allocation2 + $0xb0] sm:$0xff] 0.0
          %343 = vst [vmem:[#allocation2 + $0xb8] sm:$0xff] 0.0
          %344 = vst [vmem:[#allocation2 + $0xc0] sm:$0xff] 0.0
          %345 = vst [vmem:[#allocation2 + $0xc8] sm:$0xff] 0.0
          %346 = vst [vmem:[#allocation2 + $0xd0] sm:$0xff] 0.0
          %347 = vst [vmem:[#allocation2 + $0xd8] sm:$0xff] 0.0
          %348 = vst [vmem:[#allocation2 + $0xe0] sm:$0xff] 0.0
          %349 = vst [vmem:[#allocation2 + $0xe8] sm:$0xff] 0.0
          %350 = vst [vmem:[#allocation2 + $0xf0] sm:$0xff] 0.0
          %351 = vst [vmem:[#allocation2 + $0xf8] sm:$0xff] 0.0
          %352 = vst [vmem:[#allocation2 + $0x100] sm:$0xff] 0.0
          %353 = vst [vmem:[#allocation2 + $0x108] sm:$0xff] 0.0
          %354 = vst [vmem:[#allocation2 + $0x110] sm:$0xff] 0.0
          %355 = vst [vmem:[#allocation2 + $0x118] sm:$0xff] 0.0
          %356 = vst [vmem:[#allocation2 + $0x120] sm:$0xff] 0.0
          %357 = vst [vmem:[#allocation2 + $0x128] sm:$0xff] 0.0
          %358 = vst [vmem:[#allocation2 + $0x130] sm:$0xff] 0.0
          %359 = vst [vmem:[#allocation2 + $0x138] sm:$0xff] 0.0
          %360 = vst [vmem:[#allocation2 + $0x140] sm:$0xff] 0.0
          %361 = vst [vmem:[#allocation2 + $0x148] sm:$0xff] 0.0
          %362 = vst [vmem:[#allocation2 + $0x150] sm:$0xff] 0.0
          %363 = vst [vmem:[#allocation2 + $0x158] sm:$0xff] 0.0
          %364 = vst [vmem:[#allocation2 + $0x160] sm:$0xff] 0.0
          %365 = vst [vmem:[#allocation2 + $0x168] sm:$0xff] 0.0
          %366 = vst [vmem:[#allocation2 + $0x170] sm:$0xff] 0.0
          %367 = vst [vmem:[#allocation2 + $0x178] sm:$0xff] 0.0
          %368 = vst [vmem:[#allocation2 + $0x180] sm:$0xff] 0.0
          %369 = vst [vmem:[#allocation2 + $0x188] sm:$0xff] 0.0
          %370 = vst [vmem:[#allocation2 + $0x190] sm:$0xff] 0.0
          %371 = vst [vmem:[#allocation2 + $0x198] sm:$0xff] 0.0
          %372 = vst [vmem:[#allocation2 + $0x1a0] sm:$0xff] 0.0
          %373 = vst [vmem:[#allocation2 + $0x1a8] sm:$0xff] 0.0
          %374 = vst [vmem:[#allocation2 + $0x1b0] sm:$0xff] 0.0
          %375 = vst [vmem:[#allocation2 + $0x1b8] sm:$0xff] 0.0
          %376 = vst [vmem:[#allocation2 + $0x1c0] sm:$0xff] 0.0
          %377 = vst [vmem:[#allocation2 + $0x1c8] sm:$0xff] 0.0
          %378 = vst [vmem:[#allocation2 + $0x1d0] sm:$0xff] 0.0
          %379 = vst [vmem:[#allocation2 + $0x1d8] sm:$0xff] 0.0
          %380 = vst [vmem:[#allocation2 + $0x1e0] sm:$0xff] 0.0
          %381 = vst [vmem:[#allocation2 + $0x1e8] sm:$0xff] 0.0
          %382 = vst [vmem:[#allocation2 + $0x1f0] sm:$0xff] 0.0
          %383 = vst [vmem:[#allocation2 + $0x1f8] sm:$0xff] 0.0
        $region48: #{tpu_custom_call.1} parent=35 // pred_fallthru
          _
        %v384 = vld [vmem:[#allocation2] sm:$0xff]
        %v385 = vld [vmem:[#allocation2 + $0x8] sm:$0xff]
        %v386 = vld [vmem:[#allocation2 + $0x10] sm:$0xff]
        %v387 = vld [vmem:[#allocation2 + $0x18] sm:$0xff]
        %v388 = vld [vmem:[#allocation2 + $0x20] sm:$0xff]
        %v389 = vld [vmem:[#allocation2 + $0x28] sm:$0xff]
        %v390 = vld [vmem:[#allocation2 + $0x30] sm:$0xff]
        %v391 = vld [vmem:[#allocation2 + $0x38] sm:$0xff]
        %v392 = vld [vmem:[#allocation2 + $0x40] sm:$0xff]
        %v393 = vld [vmem:[#allocation2 + $0x48] sm:$0xff]
        %v394 = vld [vmem:[#allocation2 + $0x50] sm:$0xff]
        %v395 = vld [vmem:[#allocation2 + $0x58] sm:$0xff]
        %v396 = vld [vmem:[#allocation2 + $0x60] sm:$0xff]
        %v397 = vld [vmem:[#allocation2 + $0x68] sm:$0xff]
        %v398 = vld [vmem:[#allocation2 + $0x70] sm:$0xff]
        %v399 = vld [vmem:[#allocation2 + $0x78] sm:$0xff]
        %v400 = vld [vmem:[#allocation2 + $0x80] sm:$0xff]
        %v401 = vld [vmem:[#allocation2 + $0x88] sm:$0xff]
        %v402 = vld [vmem:[#allocation2 + $0x90] sm:$0xff]
        %v403 = vld [vmem:[#allocation2 + $0x98] sm:$0xff]
        %v404 = vld [vmem:[#allocation2 + $0xa0] sm:$0xff]
        %v405 = vld [vmem:[#allocation2 + $0xa8] sm:$0xff]
        %v406 = vld [vmem:[#allocation2 + $0xb0] sm:$0xff]
        %v407 = vld [vmem:[#allocation2 + $0xb8] sm:$0xff]
        %v408 = vld [vmem:[#allocation2 + $0xc0] sm:$0xff]
        %v409 = vld [vmem:[#allocation2 + $0xc8] sm:$0xff]
        %v410 = vld [vmem:[#allocation2 + $0xd0] sm:$0xff]
        %v411 = vld [vmem:[#allocation2 + $0xd8] sm:$0xff]
        %v412 = vld [vmem:[#allocation2 + $0xe0] sm:$0xff]
        %v413 = vld [vmem:[#allocation2 + $0xe8] sm:$0xff]
        %v414 = vld [vmem:[#allocation2 + $0xf0] sm:$0xff]
        %v415 = vld [vmem:[#allocation2 + $0xf8] sm:$0xff]
        %v416 = vld [vmem:[#allocation2 + $0x100] sm:$0xff]
        %v417 = vld [vmem:[#allocation2 + $0x108] sm:$0xff]
        %v418 = vld [vmem:[#allocation2 + $0x110] sm:$0xff]
        %v419 = vld [vmem:[#allocation2 + $0x118] sm:$0xff]
        %v420 = vld [vmem:[#allocation2 + $0x120] sm:$0xff]
        %v421 = vld [vmem:[#allocation2 + $0x128] sm:$0xff]
        %v422 = vld [vmem:[#allocation2 + $0x130] sm:$0xff]
        %v423 = vld [vmem:[#allocation2 + $0x138] sm:$0xff]
        %v424 = vld [vmem:[#allocation2 + $0x140] sm:$0xff]
        %v425 = vld [vmem:[#allocation2 + $0x148] sm:$0xff]
        %v426 = vld [vmem:[#allocation2 + $0x150] sm:$0xff]
        %v427 = vld [vmem:[#allocation2 + $0x158] sm:$0xff]
        %v428 = vld [vmem:[#allocation2 + $0x160] sm:$0xff]
        %v429 = vld [vmem:[#allocation2 + $0x168] sm:$0xff]
        %v430 = vld [vmem:[#allocation2 + $0x170] sm:$0xff]
        %v431 = vld [vmem:[#allocation2 + $0x178] sm:$0xff]
        %v432 = vld [vmem:[#allocation2 + $0x180] sm:$0xff]
        %v433 = vld [vmem:[#allocation2 + $0x188] sm:$0xff]
        %v434 = vld [vmem:[#allocation2 + $0x190] sm:$0xff]
        %v435 = vld [vmem:[#allocation2 + $0x198] sm:$0xff]
        %v436 = vld [vmem:[#allocation2 + $0x1a0] sm:$0xff]
        %v437 = vld [vmem:[#allocation2 + $0x1a8] sm:$0xff]
        %v438 = vld [vmem:[#allocation2 + $0x1b0] sm:$0xff]
        %v439 = vld [vmem:[#allocation2 + $0x1b8] sm:$0xff]
        %v440 = vld [vmem:[#allocation2 + $0x1c0] sm:$0xff]
        %v441 = vld [vmem:[#allocation2 + $0x1c8] sm:$0xff]
        %v442 = vld [vmem:[#allocation2 + $0x1d0] sm:$0xff]
        %v443 = vld [vmem:[#allocation2 + $0x1d8] sm:$0xff]
        %v444 = vld [vmem:[#allocation2 + $0x1e0] sm:$0xff]
        %v445 = vld [vmem:[#allocation2 + $0x1e8] sm:$0xff]
        %v446 = vld [vmem:[#allocation2 + $0x1f0] sm:$0xff]
        %v447 = vld [vmem:[#allocation2 + $0x1f8] sm:$0xff]
        %v448 = vld [vmem:[%s261] sm:$0xf]
        %v449 = vld [vmem:[%s261 + $0x4] sm:$0xf]
        %v450 = vld [vmem:[%s261 + $0x8] sm:$0xf]
        %v451 = vld [vmem:[%s261 + $0xc] sm:$0xf]
        %v452 = vld [vmem:[%s261 + $0x10] sm:$0xf]
        %v453 = vld [vmem:[%s261 + $0x14] sm:$0xf]
        %v454 = vld [vmem:[%s261 + $0x18] sm:$0xf]
        %v455 = vld [vmem:[%s261 + $0x1c] sm:$0xf]
        %v456 = vld [vmem:[%s261 + $0x20] sm:$0xf]
        %v457 = vld [vmem:[%s261 + $0x24] sm:$0xf]
        %v458 = vld [vmem:[%s261 + $0x28] sm:$0xf]
        %v459 = vld [vmem:[%s261 + $0x2c] sm:$0xf]
        %v460 = vld [vmem:[%s261 + $0x30] sm:$0xf]
        %v461 = vld [vmem:[%s261 + $0x34] sm:$0xf]
        %v462 = vld [vmem:[%s261 + $0x38] sm:$0xf]
        %v463 = vld [vmem:[%s261 + $0x3c] sm:$0xf]
        %v464 = vld [vmem:[%s261 + $0x40] sm:$0xf]
        %v465 = vld [vmem:[%s261 + $0x44] sm:$0xf]
        %v466 = vld [vmem:[%s261 + $0x48] sm:$0xf]
        %v467 = vld [vmem:[%s261 + $0x4c] sm:$0xf]
        %v468 = vld [vmem:[%s261 + $0x50] sm:$0xf]
        %v469 = vld [vmem:[%s261 + $0x54] sm:$0xf]
        %v470 = vld [vmem:[%s261 + $0x58] sm:$0xf]
        %v471 = vld [vmem:[%s261 + $0x5c] sm:$0xf]
        %v472 = vld [vmem:[%s261 + $0x60] sm:$0xf]
        %v473 = vld [vmem:[%s261 + $0x64] sm:$0xf]
        %v474 = vld [vmem:[%s261 + $0x68] sm:$0xf]
        %v475 = vld [vmem:[%s261 + $0x6c] sm:$0xf]
        %v476 = vld [vmem:[%s261 + $0x70] sm:$0xf]
        %v477 = vld [vmem:[%s261 + $0x74] sm:$0xf]
        %v478 = vld [vmem:[%s261 + $0x78] sm:$0xf]
        %v479 = vld [vmem:[%s261 + $0x7c] sm:$0xf]
        %v480 = vld [vmem:[%s261 + $0x80] sm:$0xf]
        %v481 = vld [vmem:[%s261 + $0x84] sm:$0xf]
        %v482 = vld [vmem:[%s261 + $0x88] sm:$0xf]
        %v483 = vld [vmem:[%s261 + $0x8c] sm:$0xf]
        %v484 = vld [vmem:[%s261 + $0x90] sm:$0xf]
        %v485 = vld [vmem:[%s261 + $0x94] sm:$0xf]
        %v486 = vld [vmem:[%s261 + $0x98] sm:$0xf]
        %v487 = vld [vmem:[%s261 + $0x9c] sm:$0xf]
        %v488 = vld [vmem:[%s261 + $0xa0] sm:$0xf]
        %v489 = vld [vmem:[%s261 + $0xa4] sm:$0xf]
        %v490 = vld [vmem:[%s261 + $0xa8] sm:$0xf]
        %v491 = vld [vmem:[%s261 + $0xac] sm:$0xf]
        %v492 = vld [vmem:[%s261 + $0xb0] sm:$0xf]
        %v493 = vld [vmem:[%s261 + $0xb4] sm:$0xf]
        %v494 = vld [vmem:[%s261 + $0xb8] sm:$0xf]
        %v495 = vld [vmem:[%s261 + $0xbc] sm:$0xf]
        %v496 = vld [vmem:[%s261 + $0xc0] sm:$0xf]
        %v497 = vld [vmem:[%s261 + $0xc4] sm:$0xf]
        %v498 = vld [vmem:[%s261 + $0xc8] sm:$0xf]
        %v499 = vld [vmem:[%s261 + $0xcc] sm:$0xf]
        %v500 = vld [vmem:[%s261 + $0xd0] sm:$0xf]
        %v501 = vld [vmem:[%s261 + $0xd4] sm:$0xf]
        %v502 = vld [vmem:[%s261 + $0xd8] sm:$0xf]
        %v503 = vld [vmem:[%s261 + $0xdc] sm:$0xf]
        %v504 = vld [vmem:[%s261 + $0xe0] sm:$0xf]
        %v505 = vld [vmem:[%s261 + $0xe4] sm:$0xf]
        %v506 = vld [vmem:[%s261 + $0xe8] sm:$0xf]
        %v507 = vld [vmem:[%s261 + $0xec] sm:$0xf]
        %v508 = vld [vmem:[%s261 + $0xf0] sm:$0xf]
        %v509 = vld [vmem:[%s261 + $0xf4] sm:$0xf]
        %v510 = vld [vmem:[%s261 + $0xf8] sm:$0xf]
        %v511 = vld [vmem:[%s261 + $0xfc] sm:$0xf]
        %v512 = vld [vmem:[%s270] sm:$0xf]
        %v513 = vld [vmem:[%s270 + $0x4] sm:$0xf]
        %v514 = vld [vmem:[%s270 + $0x8] sm:$0xf]
        %v515 = vld [vmem:[%s270 + $0xc] sm:$0xf]
        %v516 = vld [vmem:[%s270 + $0x10] sm:$0xf]
        %v517 = vld [vmem:[%s270 + $0x14] sm:$0xf]
        %v518 = vld [vmem:[%s270 + $0x18] sm:$0xf]
        %v519 = vld [vmem:[%s270 + $0x1c] sm:$0xf]
        %v520 = vld [vmem:[%s270 + $0x20] sm:$0xf]
        %v521 = vld [vmem:[%s270 + $0x24] sm:$0xf]
        %v522 = vld [vmem:[%s270 + $0x28] sm:$0xf]
        %v523 = vld [vmem:[%s270 + $0x2c] sm:$0xf]
        %v524 = vld [vmem:[%s270 + $0x30] sm:$0xf]
        %v525 = vld [vmem:[%s270 + $0x34] sm:$0xf]
        %v526 = vld [vmem:[%s270 + $0x38] sm:$0xf]
        %v527 = vld [vmem:[%s270 + $0x3c] sm:$0xf]
        %v592 = vunpack.c.l.b16 %v448
        %v593 = vunpack.c.l.b16 %v449
        %v594 = vunpack.c.l.b16 %v450
        %v595 = vunpack.c.l.b16 %v451
        %v596 = vunpack.c.l.b16 %v452
        %v597 = vunpack.c.l.b16 %v453
        %v598 = vunpack.c.l.b16 %v454
        %v599 = vunpack.c.l.b16 %v455
        %v600 = vunpack.c.l.b16 %v456
        %v601 = vunpack.c.l.b16 %v457
        %v602 = vunpack.c.l.b16 %v458
        %v603 = vunpack.c.l.b16 %v459
        %v604 = vunpack.c.l.b16 %v460
        %v605 = vunpack.c.l.b16 %v461
        %v606 = vunpack.c.l.b16 %v462
        %v607 = vunpack.c.l.b16 %v463
        %v608 = vunpack.c.l.b16 %v464
        %v609 = vunpack.c.l.b16 %v465
        %v610 = vunpack.c.l.b16 %v466
        %v611 = vunpack.c.l.b16 %v467
        %v612 = vunpack.c.l.b16 %v468
        %v613 = vunpack.c.l.b16 %v469
        %v614 = vunpack.c.l.b16 %v470
        %v615 = vunpack.c.l.b16 %v471
        %v616 = vunpack.c.l.b16 %v472
        %v617 = vunpack.c.l.b16 %v473
        %v618 = vunpack.c.l.b16 %v474
        %v619 = vunpack.c.l.b16 %v475
        %v620 = vunpack.c.l.b16 %v476
        %v621 = vunpack.c.l.b16 %v477
        %v622 = vunpack.c.l.b16 %v478
        %v623 = vunpack.c.l.b16 %v479
        %v624 = vunpack.c.l.b16 %v480
        %v625 = vunpack.c.l.b16 %v481
        %v626 = vunpack.c.l.b16 %v482
        %v627 = vunpack.c.l.b16 %v483
        %v628 = vunpack.c.l.b16 %v484
        %v629 = vunpack.c.l.b16 %v485
        %v630 = vunpack.c.l.b16 %v486
        %v631 = vunpack.c.l.b16 %v487
        %v632 = vunpack.c.l.b16 %v488
        %v633 = vunpack.c.l.b16 %v489
        %v634 = vunpack.c.l.b16 %v490
        %v635 = vunpack.c.l.b16 %v491
        %v636 = vunpack.c.l.b16 %v492
        %v637 = vunpack.c.l.b16 %v493
        %v638 = vunpack.c.l.b16 %v494
        %v639 = vunpack.c.l.b16 %v495
        %v640 = vunpack.c.l.b16 %v496
        %v641 = vunpack.c.l.b16 %v497
        %v642 = vunpack.c.l.b16 %v498
        %v643 = vunpack.c.l.b16 %v499
        %v644 = vunpack.c.l.b16 %v500
        %v645 = vunpack.c.l.b16 %v501
        %v646 = vunpack.c.l.b16 %v502
        %v647 = vunpack.c.l.b16 %v503
        %v648 = vunpack.c.l.b16 %v504
        %v649 = vunpack.c.l.b16 %v505
        %v650 = vunpack.c.l.b16 %v506
        %v651 = vunpack.c.l.b16 %v507
        %v652 = vunpack.c.l.b16 %v508
        %v653 = vunpack.c.l.b16 %v509
        %v654 = vunpack.c.l.b16 %v510
        %v655 = vunpack.c.l.b16 %v511
        %v656 = vpack.c.b16 %v593, %v592
        %v657 = vpack.c.b16 %v595, %v594
        %v658 = vpack.c.b16 %v597, %v596
        %v659 = vpack.c.b16 %v599, %v598
        %v660 = vpack.c.b16 %v601, %v600
        %v661 = vpack.c.b16 %v603, %v602
        %v662 = vpack.c.b16 %v605, %v604
        %v663 = vpack.c.b16 %v607, %v606
        %v664 = vpack.c.b16 %v609, %v608
        %v665 = vpack.c.b16 %v611, %v610
        %v666 = vpack.c.b16 %v613, %v612
        %v667 = vpack.c.b16 %v615, %v614
        %v668 = vpack.c.b16 %v617, %v616
        %v669 = vpack.c.b16 %v619, %v618
        %v670 = vpack.c.b16 %v621, %v620
        %v671 = vpack.c.b16 %v623, %v622
        %v672 = vpack.c.b16 %v625, %v624
        %v673 = vpack.c.b16 %v627, %v626
        %v674 = vpack.c.b16 %v629, %v628
        %v675 = vpack.c.b16 %v631, %v630
        %v676 = vpack.c.b16 %v633, %v632
        %v677 = vpack.c.b16 %v635, %v634
        %v678 = vpack.c.b16 %v637, %v636
        %v679 = vpack.c.b16 %v639, %v638
        %v680 = vpack.c.b16 %v641, %v640
        %v681 = vpack.c.b16 %v643, %v642
        %v682 = vpack.c.b16 %v645, %v644
        %v683 = vpack.c.b16 %v647, %v646
        %v684 = vpack.c.b16 %v649, %v648
        %v685 = vpack.c.b16 %v651, %v650
        %v686 = vpack.c.b16 %v653, %v652
        %v687 = vpack.c.b16 %v655, %v654
        %v736 = vunpack.c.l.b16 %v512
        %v737 = vunpack.c.l.b16 %v513
        %v738 = vunpack.c.l.b16 %v514
        %v739 = vunpack.c.l.b16 %v515
        %v740 = vunpack.c.l.b16 %v516
        %v741 = vunpack.c.l.b16 %v517
        %v742 = vunpack.c.l.b16 %v518
        %v743 = vunpack.c.l.b16 %v519
        %v744 = vunpack.c.l.b16 %v520
        %v745 = vunpack.c.l.b16 %v521
        %v746 = vunpack.c.l.b16 %v522
        %v747 = vunpack.c.l.b16 %v523
        %v748 = vunpack.c.l.b16 %v524
        %v749 = vunpack.c.l.b16 %v525
        %v750 = vunpack.c.l.b16 %v526
        %v751 = vunpack.c.l.b16 %v527
        %v752 = vpack.c.b16 %v737, %v736
        %v753 = vpack.c.b16 %v739, %v738
        %v754 = vpack.c.b16 %v741, %v740
        %v755 = vpack.c.b16 %v743, %v742
        %v756 = vpack.c.b16 %v745, %v744
        %v757 = vpack.c.b16 %v747, %v746
        %v758 = vpack.c.b16 %v749, %v748
        %v759 = vpack.c.b16 %v751, %v750
        %768 = vmatprep.subr.bf16.mxu0 0
        %769 = vmatpush1.bf16.msra.mxu0 %v752
        %770 = vmatprep.subr.bf16.mxu0 0
        %771 = vmatpush1.bf16.msra.mxu0 %v753
        %772 = vmatprep.subr.bf16.mxu0 0
        %773 = vmatpush1.bf16.msra.mxu0 %v754
        %774 = vmatprep.subr.bf16.mxu0 0
        %775 = vmatpush1.bf16.msra.mxu0 %v755
        %776 = vmatprep.subr.bf16.mxu0 0
        %777 = vmatpush1.bf16.msra.mxu0 %v756
        %778 = vmatprep.subr.bf16.mxu0 0
        %779 = vmatpush1.bf16.msra.mxu0 %v757
        %780 = vmatprep.subr.bf16.mxu0 0
        %781 = vmatpush1.bf16.msra.mxu0 %v758
        %782 = vmatprep.subr.bf16.mxu0 0
        %783 = vmatpush1.bf16.msra.mxu0 %v759
        %784 = vmatprep.subr.bf16.mxu0 0
        %785 = vmatpush1.bf16.msra.mxu0 0
        %786 = vmatprep.subr.bf16.mxu0 0
        %787 = vmatpush1.bf16.msra.mxu0 0
        %788 = vmatprep.subr.bf16.mxu0 0
        %789 = vmatpush1.bf16.msra.mxu0 0
        %790 = vmatprep.subr.bf16.mxu0 0
        %791 = vmatpush1.bf16.msra.mxu0 0
        %792 = vmatprep.subr.bf16.mxu0 0
        %793 = vmatpush1.bf16.msra.mxu0 0
        %794 = vmatprep.subr.bf16.mxu0 0
        %795 = vmatpush1.bf16.msra.mxu0 0
        %796 = vmatprep.subr.bf16.mxu0 0
        %797 = vmatpush1.bf16.msra.mxu0 0
        %798 = vmatprep.subr.bf16.mxu0 0
        %799 = vmatpush1.bf16.msra.mxu0 0
        %800 = vmatprep.mubr.bf16.mxu0 0
        %801 = vmatmul.mubr.bf16.gmra.mrb[0].mxu0 %v656
        %v802 = vpop.f32.mrb[0].mxu0
        %v803 = vadd.f32 0.0, %v802
        %v804 = vpop.f32.mrb[0].mxu0
        %v805 = vpop.f32.mrb[0].mxu0
        %v806 = vadd.f32 0.0, %v805
        %v807 = vpop.f32.mrb[0].mxu0
        %808 = vmatprep.mubr.bf16.mxu0 0
        %809 = vmatmul.mubr.bf16.gmra.mrb[0].mxu0 %v657
        %v810 = vpop.f32.mrb[0].mxu0
        %v811 = vadd.f32 0.0, %v810
        %v812 = vpop.f32.mrb[0].mxu0
        %v813 = vpop.f32.mrb[0].mxu0
        %v814 = vadd.f32 0.0, %v813
        %v815 = vpop.f32.mrb[0].mxu0
        %816 = vmatprep.mubr.bf16.mxu0 0
        %817 = vmatmul.mubr.bf16.gmra.mrb[0].mxu0 %v658
        %v818 = vpop.f32.mrb[0].mxu0
        %v819 = vadd.f32 0.0, %v818
        %v820 = vpop.f32.mrb[0].mxu0
        %v821 = vpop.f32.mrb[0].mxu0
        %v822 = vadd.f32 0.0, %v821
        %v823 = vpop.f32.mrb[0].mxu0
        %824 = vmatprep.mubr.bf16.mxu0 0
        %825 = vmatmul.mubr.bf16.gmra.mrb[0].mxu0 %v659
        %v826 = vpop.f32.mrb[0].mxu0
        %v827 = vadd.f32 0.0, %v826
        %v828 = vpop.f32.mrb[0].mxu0
        %v829 = vpop.f32.mrb[0].mxu0
        %v830 = vadd.f32 0.0, %v829
        %v831 = vpop.f32.mrb[0].mxu0
        %832 = vmatprep.mubr.bf16.mxu0 0
        %833 = vmatmul.mubr.bf16.gmra.mrb[0].mxu0 %v660
        %v834 = vpop.f32.mrb[0].mxu0
        %v835 = vadd.f32 0.0, %v834
        %v836 = vpop.f32.mrb[0].mxu0
        %v837 = vpop.f32.mrb[0].mxu0
        %v838 = vadd.f32 0.0, %v837
        %v839 = vpop.f32.mrb[0].mxu0
        %840 = vmatprep.mubr.bf16.mxu0 0
        %841 = vmatmul.mubr.bf16.gmra.mrb[0].mxu0 %v661
        %v842 = vpop.f32.mrb[0].mxu0
        %v843 = vadd.f32 0.0, %v842
        %v844 = vpop.f32.mrb[0].mxu0
        %v845 = vpop.f32.mrb[0].mxu0
        %v846 = vadd.f32 0.0, %v845
        %v847 = vpop.f32.mrb[0].mxu0
        %848 = vmatprep.mubr.bf16.mxu0 0
        %849 = vmatmul.mubr.bf16.gmra.mrb[0].mxu0 %v662
        %v850 = vpop.f32.mrb[0].mxu0
        %v851 = vadd.f32 0.0, %v850
        %v852 = vpop.f32.mrb[0].mxu0
        %v853 = vpop.f32.mrb[0].mxu0
        %v854 = vadd.f32 0.0, %v853
        %v855 = vpop.f32.mrb[0].mxu0
        %856 = vmatprep.mubr.bf16.mxu0 0
        %857 = vmatmul.mubr.bf16.gmra.mrb[0].mxu0 %v663
        %v858 = vpop.f32.mrb[0].mxu0
        %v859 = vadd.f32 0.0, %v858
        %v860 = vpop.f32.mrb[0].mxu0
        %v861 = vpop.f32.mrb[0].mxu0
        %v862 = vadd.f32 0.0, %v861
        %v863 = vpop.f32.mrb[0].mxu0
        %864 = vmatprep.mubr.bf16.mxu0 0
        %865 = vmatmul.mubr.bf16.gmra.mrb[0].mxu0 %v664
        %v866 = vpop.f32.mrb[0].mxu0
        %v867 = vadd.f32 0.0, %v866
        %v868 = vpop.f32.mrb[0].mxu0
        %v869 = vpop.f32.mrb[0].mxu0
        %v870 = vadd.f32 0.0, %v869
        %v871 = vpop.f32.mrb[0].mxu0
        %872 = vmatprep.mubr.bf16.mxu0 0
        %873 = vmatmul.mubr.bf16.gmra.mrb[0].mxu0 %v665
        %v874 = vpop.f32.mrb[0].mxu0
        %v875 = vadd.f32 0.0, %v874
        %v876 = vpop.f32.mrb[0].mxu0
        %v877 = vpop.f32.mrb[0].mxu0
        %v878 = vadd.f32 0.0, %v877
        %v879 = vpop.f32.mrb[0].mxu0
        %880 = vmatprep.mubr.bf16.mxu0 0
        %881 = vmatmul.mubr.bf16.gmra.mrb[0].mxu0 %v666
        %v882 = vpop.f32.mrb[0].mxu0
        %v883 = vadd.f32 0.0, %v882
        %v884 = vpop.f32.mrb[0].mxu0
        %v885 = vpop.f32.mrb[0].mxu0
        %v886 = vadd.f32 0.0, %v885
        %v887 = vpop.f32.mrb[0].mxu0
        %888 = vmatprep.mubr.bf16.mxu0 0
        %889 = vmatmul.mubr.bf16.gmra.mrb[0].mxu0 %v667
        %v890 = vpop.f32.mrb[0].mxu0
        %v891 = vadd.f32 0.0, %v890
        %v892 = vpop.f32.mrb[0].mxu0
        %v893 = vpop.f32.mrb[0].mxu0
        %v894 = vadd.f32 0.0, %v893
        %v895 = vpop.f32.mrb[0].mxu0
        %896 = vmatprep.mubr.bf16.mxu0 0
        %897 = vmatmul.mubr.bf16.gmra.mrb[0].mxu0 %v668
        %v898 = vpop.f32.mrb[0].mxu0
        %v899 = vadd.f32 0.0, %v898
        %v900 = vpop.f32.mrb[0].mxu0
        %v901 = vpop.f32.mrb[0].mxu0
        %v902 = vadd.f32 0.0, %v901
        %v903 = vpop.f32.mrb[0].mxu0
        %904 = vmatprep.mubr.bf16.mxu0 0
        %905 = vmatmul.mubr.bf16.gmra.mrb[0].mxu0 %v669
        %v906 = vpop.f32.mrb[0].mxu0
        %v907 = vadd.f32 0.0, %v906
        %v908 = vpop.f32.mrb[0].mxu0
        %v909 = vpop.f32.mrb[0].mxu0
        %v910 = vadd.f32 0.0, %v909
        %v911 = vpop.f32.mrb[0].mxu0
        %912 = vmatprep.mubr.bf16.mxu0 0
        %913 = vmatmul.mubr.bf16.gmra.mrb[0].mxu0 %v670
        %v914 = vpop.f32.mrb[0].mxu0
        %v915 = vadd.f32 0.0, %v914
        %v916 = vpop.f32.mrb[0].mxu0
        %v917 = vpop.f32.mrb[0].mxu0
        %v918 = vadd.f32 0.0, %v917
        %v919 = vpop.f32.mrb[0].mxu0
        %920 = vmatprep.mubr.bf16.mxu0 0
        %921 = vmatmul.mubr.bf16.gmra.mrb[0].mxu0 %v671
        %v922 = vpop.f32.mrb[0].mxu0
        %v923 = vadd.f32 0.0, %v922
        %v924 = vpop.f32.mrb[0].mxu0
        %v925 = vpop.f32.mrb[0].mxu0
        %v926 = vadd.f32 0.0, %v925
        %v927 = vpop.f32.mrb[0].mxu0
        %928 = vmatprep.mubr.bf16.mxu0 0
        %929 = vmatmul.mubr.bf16.gmra.mrb[0].mxu0 %v672
        %v930 = vpop.f32.mrb[0].mxu0
        %v931 = vadd.f32 0.0, %v930
        %v932 = vpop.f32.mrb[0].mxu0
        %v933 = vpop.f32.mrb[0].mxu0
        %v934 = vadd.f32 0.0, %v933
        %v935 = vpop.f32.mrb[0].mxu0
        %936 = vmatprep.mubr.bf16.mxu0 0
        %937 = vmatmul.mubr.bf16.gmra.mrb[0].mxu0 %v673
        %v938 = vpop.f32.mrb[0].mxu0
        %v939 = vadd.f32 0.0, %v938
        %v940 = vpop.f32.mrb[0].mxu0
        %v941 = vpop.f32.mrb[0].mxu0
        %v942 = vadd.f32 0.0, %v941
        %v943 = vpop.f32.mrb[0].mxu0
        %944 = vmatprep.mubr.bf16.mxu0 0
        %945 = vmatmul.mubr.bf16.gmra.mrb[0].mxu0 %v674
        %v946 = vpop.f32.mrb[0].mxu0
        %v947 = vadd.f32 0.0, %v946
        %v948 = vpop.f32.mrb[0].mxu0
        %v949 = vpop.f32.mrb[0].mxu0
        %v950 = vadd.f32 0.0, %v949
        %v951 = vpop.f32.mrb[0].mxu0
        %952 = vmatprep.mubr.bf16.mxu0 0
        %953 = vmatmul.mubr.bf16.gmra.mrb[0].mxu0 %v675
        %v954 = vpop.f32.mrb[0].mxu0
        %v955 = vadd.f32 0.0, %v954
        %v956 = vpop.f32.mrb[0].mxu0
        %v957 = vpop.f32.mrb[0].mxu0
        %v958 = vadd.f32 0.0, %v957
        %v959 = vpop.f32.mrb[0].mxu0
        %960 = vmatprep.mubr.bf16.mxu0 0
        %961 = vmatmul.mubr.bf16.gmra.mrb[0].mxu0 %v676
        %v962 = vpop.f32.mrb[0].mxu0
        %v963 = vadd.f32 0.0, %v962
        %v964 = vpop.f32.mrb[0].mxu0
        %v965 = vpop.f32.mrb[0].mxu0
        %v966 = vadd.f32 0.0, %v965
        %v967 = vpop.f32.mrb[0].mxu0
        %968 = vmatprep.mubr.bf16.mxu0 0
        %969 = vmatmul.mubr.bf16.gmra.mrb[0].mxu0 %v677
        %v970 = vpop.f32.mrb[0].mxu0
        %v971 = vadd.f32 0.0, %v970
        %v972 = vpop.f32.mrb[0].mxu0
        %v973 = vpop.f32.mrb[0].mxu0
        %v974 = vadd.f32 0.0, %v973
        %v975 = vpop.f32.mrb[0].mxu0
        %976 = vmatprep.mubr.bf16.mxu0 0
        %977 = vmatmul.mubr.bf16.gmra.mrb[0].mxu0 %v678
        %v978 = vpop.f32.mrb[0].mxu0
        %v979 = vadd.f32 0.0, %v978
        %v980 = vpop.f32.mrb[0].mxu0
        %v981 = vpop.f32.mrb[0].mxu0
        %v982 = vadd.f32 0.0, %v981
        %v983 = vpop.f32.mrb[0].mxu0
        %984 = vmatprep.mubr.bf16.mxu0 0
        %985 = vmatmul.mubr.bf16.gmra.mrb[0].mxu0 %v679
        %v986 = vpop.f32.mrb[0].mxu0
        %v987 = vadd.f32 0.0, %v986
        %v988 = vpop.f32.mrb[0].mxu0
        %v989 = vpop.f32.mrb[0].mxu0
        %v990 = vadd.f32 0.0, %v989
        %v991 = vpop.f32.mrb[0].mxu0
        %992 = vmatprep.mubr.bf16.mxu0 0
        %993 = vmatmul.mubr.bf16.gmra.mrb[0].mxu0 %v680
        %v994 = vpop.f32.mrb[0].mxu0
        %v995 = vadd.f32 0.0, %v994
        %v996 = vpop.f32.mrb[0].mxu0
        %v997 = vpop.f32.mrb[0].mxu0
        %v998 = vadd.f32 0.0, %v997
        %v999 = vpop.f32.mrb[0].mxu0
        %1000 = vmatprep.mubr.bf16.mxu0 0
        %1001 = vmatmul.mubr.bf16.gmra.mrb[0].mxu0 %v681
        %v1002 = vpop.f32.mrb[0].mxu0
        %v1003 = vadd.f32 0.0, %v1002
        %v1004 = vpop.f32.mrb[0].mxu0
        %v1005 = vpop.f32.mrb[0].mxu0
        %v1006 = vadd.f32 0.0, %v1005
        %v1007 = vpop.f32.mrb[0].mxu0
        %1008 = vmatprep.mubr.bf16.mxu0 0
        %1009 = vmatmul.mubr.bf16.gmra.mrb[0].mxu0 %v682
        %v1010 = vpop.f32.mrb[0].mxu0
        %v1011 = vadd.f32 0.0, %v1010
        %v1012 = vpop.f32.mrb[0].mxu0
        %v1013 = vpop.f32.mrb[0].mxu0
        %v1014 = vadd.f32 0.0, %v1013
        %v1015 = vpop.f32.mrb[0].mxu0
        %1016 = vmatprep.mubr.bf16.mxu0 0
        %1017 = vmatmul.mubr.bf16.gmra.mrb[0].mxu0 %v683
        %v1018 = vpop.f32.mrb[0].mxu0
        %v1019 = vadd.f32 0.0, %v1018
        %v1020 = vpop.f32.mrb[0].mxu0
        %v1021 = vpop.f32.mrb[0].mxu0
        %v1022 = vadd.f32 0.0, %v1021
        %v1023 = vpop.f32.mrb[0].mxu0
        %1024 = vmatprep.mubr.bf16.mxu0 0
        %1025 = vmatmul.mubr.bf16.gmra.mrb[0].mxu0 %v684
        %v1026 = vpop.f32.mrb[0].mxu0
        %v1027 = vadd.f32 0.0, %v1026
        %v1028 = vpop.f32.mrb[0].mxu0
        %v1029 = vpop.f32.mrb[0].mxu0
        %v1030 = vadd.f32 0.0, %v1029
        %v1031 = vpop.f32.mrb[0].mxu0
        %1032 = vmatprep.mubr.bf16.mxu0 0
        %1033 = vmatmul.mubr.bf16.gmra.mrb[0].mxu0 %v685
        %v1034 = vpop.f32.mrb[0].mxu0
        %v1035 = vadd.f32 0.0, %v1034
        %v1036 = vpop.f32.mrb[0].mxu0
        %v1037 = vpop.f32.mrb[0].mxu0
        %v1038 = vadd.f32 0.0, %v1037
        %v1039 = vpop.f32.mrb[0].mxu0
        %1040 = vmatprep.mubr.bf16.mxu0 0
        %1041 = vmatmul.mubr.bf16.gmra.mrb[0].mxu0 %v686
        %v1042 = vpop.f32.mrb[0].mxu0
        %v1043 = vadd.f32 0.0, %v1042
        %v1044 = vpop.f32.mrb[0].mxu0
        %v1045 = vpop.f32.mrb[0].mxu0
        %v1046 = vadd.f32 0.0, %v1045
        %v1047 = vpop.f32.mrb[0].mxu0
        %1048 = vmatprep.mubr.bf16.mxu0 0
        %1049 = vmatmul.mubr.bf16.gmra.mrb[0].mxu0 %v687
        %v1050 = vpop.f32.mrb[0].mxu0
        %v1051 = vadd.f32 0.0, %v1050
        %v1052 = vpop.f32.mrb[0].mxu0
        %v1053 = vpop.f32.mrb[0].mxu0
        %v1054 = vadd.f32 0.0, %v1053
        %v1055 = vpop.f32.mrb[0].mxu0
        %1056 = vdwg.mxu0
        %v1057 = vadd.f32 %v384, %v803
        %v1058 = vadd.f32 %v385, %v806
        %v1059 = vadd.f32 %v386, %v811
        %v1060 = vadd.f32 %v387, %v814
        %v1061 = vadd.f32 %v388, %v819
        %v1062 = vadd.f32 %v389, %v822
        %v1063 = vadd.f32 %v390, %v827
        %v1064 = vadd.f32 %v391, %v830
        %v1065 = vadd.f32 %v392, %v835
        %v1066 = vadd.f32 %v393, %v838
        %v1067 = vadd.f32 %v394, %v843
        %v1068 = vadd.f32 %v395, %v846
        %v1069 = vadd.f32 %v396, %v851
        %v1070 = vadd.f32 %v397, %v854
        %v1071 = vadd.f32 %v398, %v859
        %v1072 = vadd.f32 %v399, %v862
        %v1073 = vadd.f32 %v400, %v867
        %v1074 = vadd.f32 %v401, %v870
        %v1075 = vadd.f32 %v402, %v875
        %v1076 = vadd.f32 %v403, %v878
        %v1077 = vadd.f32 %v404, %v883
        %v1078 = vadd.f32 %v405, %v886
        %v1079 = vadd.f32 %v406, %v891
        %v1080 = vadd.f32 %v407, %v894
        %v1081 = vadd.f32 %v408, %v899
        %v1082 = vadd.f32 %v409, %v902
        %v1083 = vadd.f32 %v410, %v907
        %v1084 = vadd.f32 %v411, %v910
        %v1085 = vadd.f32 %v412, %v915
        %v1086 = vadd.f32 %v413, %v918
        %v1087 = vadd.f32 %v414, %v923
        %v1088 = vadd.f32 %v415, %v926
        %v1089 = vadd.f32 %v416, %v931
        %v1090 = vadd.f32 %v417, %v934
        %v1091 = vadd.f32 %v418, %v939
        %v1092 = vadd.f32 %v419, %v942
        %v1093 = vadd.f32 %v420, %v947
        %v1094 = vadd.f32 %v421, %v950
        %v1095 = vadd.f32 %v422, %v955
        %v1096 = vadd.f32 %v423, %v958
        %v1097 = vadd.f32 %v424, %v963
        %v1098 = vadd.f32 %v425, %v966
        %v1099 = vadd.f32 %v426, %v971
        %v1100 = vadd.f32 %v427, %v974
        %v1101 = vadd.f32 %v428, %v979
        %v1102 = vadd.f32 %v429, %v982
        %v1103 = vadd.f32 %v430, %v987
        %v1104 = vadd.f32 %v431, %v990
        %v1105 = vadd.f32 %v432, %v995
        %v1106 = vadd.f32 %v433, %v998
        %v1107 = vadd.f32 %v434, %v1003
        %v1108 = vadd.f32 %v435, %v1006
        %v1109 = vadd.f32 %v436, %v1011
        %v1110 = vadd.f32 %v437, %v1014
        %v1111 = vadd.f32 %v438, %v1019
        %v1112 = vadd.f32 %v439, %v1022
        %v1113 = vadd.f32 %v440, %v1027
        %v1114 = vadd.f32 %v441, %v1030
        %v1115 = vadd.f32 %v442, %v1035
        %v1116 = vadd.f32 %v443, %v1038
        %v1117 = vadd.f32 %v444, %v1043
        %v1118 = vadd.f32 %v445, %v1046
        %v1119 = vadd.f32 %v446, %v1051
        %v1120 = vadd.f32 %v447, %v1054
        %1121 = vst [vmem:[#allocation2] sm:$0xff] %v1057
        %1122 = vst [vmem:[#allocation2 + $0x8] sm:$0xff] %v1058
        %1123 = vst [vmem:[#allocation2 + $0x10] sm:$0xff] %v1059
        %1124 = vst [vmem:[#allocation2 + $0x18] sm:$0xff] %v1060
        %1125 = vst [vmem:[#allocation2 + $0x20] sm:$0xff] %v1061
        %1126 = vst [vmem:[#allocation2 + $0x28] sm:$0xff] %v1062
        %1127 = vst [vmem:[#allocation2 + $0x30] sm:$0xff] %v1063
        %1128 = vst [vmem:[#allocation2 + $0x38] sm:$0xff] %v1064
        %1129 = vst [vmem:[#allocation2 + $0x40] sm:$0xff] %v1065
        %1130 = vst [vmem:[#allocation2 + $0x48] sm:$0xff] %v1066
        %1131 = vst [vmem:[#allocation2 + $0x50] sm:$0xff] %v1067
        %1132 = vst [vmem:[#allocation2 + $0x58] sm:$0xff] %v1068
        %1133 = vst [vmem:[#allocation2 + $0x60] sm:$0xff] %v1069
        %1134 = vst [vmem:[#allocation2 + $0x68] sm:$0xff] %v1070
        %1135 = vst [vmem:[#allocation2 + $0x70] sm:$0xff] %v1071
        %1136 = vst [vmem:[#allocation2 + $0x78] sm:$0xff] %v1072
        %1137 = vst [vmem:[#allocation2 + $0x80] sm:$0xff] %v1073
        %1138 = vst [vmem:[#allocation2 + $0x88] sm:$0xff] %v1074
        %1139 = vst [vmem:[#allocation2 + $0x90] sm:$0xff] %v1075
        %1140 = vst [vmem:[#allocation2 + $0x98] sm:$0xff] %v1076
        %1141 = vst [vmem:[#allocation2 + $0xa0] sm:$0xff] %v1077
        %1142 = vst [vmem:[#allocation2 + $0xa8] sm:$0xff] %v1078
        %1143 = vst [vmem:[#allocation2 + $0xb0] sm:$0xff] %v1079
        %1144 = vst [vmem:[#allocation2 + $0xb8] sm:$0xff] %v1080
        %1145 = vst [vmem:[#allocation2 + $0xc0] sm:$0xff] %v1081
        %1146 = vst [vmem:[#allocation2 + $0xc8] sm:$0xff] %v1082
        %1147 = vst [vmem:[#allocation2 + $0xd0] sm:$0xff] %v1083
        %1148 = vst [vmem:[#allocation2 + $0xd8] sm:$0xff] %v1084
        %1149 = vst [vmem:[#allocation2 + $0xe0] sm:$0xff] %v1085
        %1150 = vst [vmem:[#allocation2 + $0xe8] sm:$0xff] %v1086
        %1151 = vst [vmem:[#allocation2 + $0xf0] sm:$0xff] %v1087
        %1152 = vst [vmem:[#allocation2 + $0xf8] sm:$0xff] %v1088
        %1153 = vst [vmem:[#allocation2 + $0x100] sm:$0xff] %v1089
        %1154 = vst [vmem:[#allocation2 + $0x108] sm:$0xff] %v1090
        %1155 = vst [vmem:[#allocation2 + $0x110] sm:$0xff] %v1091
        %1156 = vst [vmem:[#allocation2 + $0x118] sm:$0xff] %v1092
        %1157 = vst [vmem:[#allocation2 + $0x120] sm:$0xff] %v1093
        %1158 = vst [vmem:[#allocation2 + $0x128] sm:$0xff] %v1094
        %1159 = vst [vmem:[#allocation2 + $0x130] sm:$0xff] %v1095
        %1160 = vst [vmem:[#allocation2 + $0x138] sm:$0xff] %v1096
        %1161 = vst [vmem:[#allocation2 + $0x140] sm:$0xff] %v1097
        %1162 = vst [vmem:[#allocation2 + $0x148] sm:$0xff] %v1098
        %1163 = vst [vmem:[#allocation2 + $0x150] sm:$0xff] %v1099
        %1164 = vst [vmem:[#allocation2 + $0x158] sm:$0xff] %v1100
        %1165 = vst [vmem:[#allocation2 + $0x160] sm:$0xff] %v1101
        %1166 = vst [vmem:[#allocation2 + $0x168] sm:$0xff] %v1102
        %1167 = vst [vmem:[#allocation2 + $0x170] sm:$0xff] %v1103
        %1168 = vst [vmem:[#allocation2 + $0x178] sm:$0xff] %v1104
        %1169 = vst [vmem:[#allocation2 + $0x180] sm:$0xff] %v1105
        %1170 = vst [vmem:[#allocation2 + $0x188] sm:$0xff] %v1106
        %1171 = vst [vmem:[#allocation2 + $0x190] sm:$0xff] %v1107
        %1172 = vst [vmem:[#allocation2 + $0x198] sm:$0xff] %v1108
        %1173 = vst [vmem:[#allocation2 + $0x1a0] sm:$0xff] %v1109
        %1174 = vst [vmem:[#allocation2 + $0x1a8] sm:$0xff] %v1110
        %1175 = vst [vmem:[#allocation2 + $0x1b0] sm:$0xff] %v1111
        %1176 = vst [vmem:[#allocation2 + $0x1b8] sm:$0xff] %v1112
        %1177 = vst [vmem:[#allocation2 + $0x1c0] sm:$0xff] %v1113
        %1178 = vst [vmem:[#allocation2 + $0x1c8] sm:$0xff] %v1114
        %1179 = vst [vmem:[#allocation2 + $0x1d0] sm:$0xff] %v1115
        %1180 = vst [vmem:[#allocation2 + $0x1d8] sm:$0xff] %v1116
        %1181 = vst [vmem:[#allocation2 + $0x1e0] sm:$0xff] %v1117
        %1182 = vst [vmem:[#allocation2 + $0x1e8] sm:$0xff] %v1118
        %1183 = vst [vmem:[#allocation2 + $0x1f0] sm:$0xff] %v1119
        %1184 = vst [vmem:[#allocation2 + $0x1f8] sm:$0xff] %v1120
        %p1185 = scmp.eq.s32.totalorder %s31, 1
        // Predicated region
        $region49: #{tpu_custom_call.1} parent=35 // pred_check
          %p1186 = pneg %p1185
        $region50: #{tpu_custom_call.1} parent=35 // pred_check_branch
          %1188 = sbr.rel (%p1186) target = $region52
        $region51: #{tpu_custom_call.1} parent=35 // pred_region
          %v1189 = vld [vmem:[#allocation2] sm:$0xff]
          %v1190 = vld [vmem:[#allocation2 + $0x8] sm:$0xff]
          %v1191 = vld [vmem:[#allocation2 + $0x10] sm:$0xff]
          %v1192 = vld [vmem:[#allocation2 + $0x18] sm:$0xff]
          %v1193 = vld [vmem:[#allocation2 + $0x20] sm:$0xff]
          %v1194 = vld [vmem:[#allocation2 + $0x28] sm:$0xff]
          %v1195 = vld [vmem:[#allocation2 + $0x30] sm:$0xff]
          %v1196 = vld [vmem:[#allocation2 + $0x38] sm:$0xff]
          %v1197 = vld [vmem:[#allocation2 + $0x40] sm:$0xff]
          %v1198 = vld [vmem:[#allocation2 + $0x48] sm:$0xff]
          %v1199 = vld [vmem:[#allocation2 + $0x50] sm:$0xff]
          %v1200 = vld [vmem:[#allocation2 + $0x58] sm:$0xff]
          %v1201 = vld [vmem:[#allocation2 + $0x60] sm:$0xff]
          %v1202 = vld [vmem:[#allocation2 + $0x68] sm:$0xff]
          %v1203 = vld [vmem:[#allocation2 + $0x70] sm:$0xff]
          %v1204 = vld [vmem:[#allocation2 + $0x78] sm:$0xff]
          %v1205 = vld [vmem:[#allocation2 + $0x80] sm:$0xff]
          %v1206 = vld [vmem:[#allocation2 + $0x88] sm:$0xff]
          %v1207 = vld [vmem:[#allocation2 + $0x90] sm:$0xff]
          %v1208 = vld [vmem:[#allocation2 + $0x98] sm:$0xff]
          %v1209 = vld [vmem:[#allocation2 + $0xa0] sm:$0xff]
          %v1210 = vld [vmem:[#allocation2 + $0xa8] sm:$0xff]
          %v1211 = vld [vmem:[#allocation2 + $0xb0] sm:$0xff]
          %v1212 = vld [vmem:[#allocation2 + $0xb8] sm:$0xff]
          %v1213 = vld [vmem:[#allocation2 + $0xc0] sm:$0xff]
          %v1214 = vld [vmem:[#allocation2 + $0xc8] sm:$0xff]
          %v1215 = vld [vmem:[#allocation2 + $0xd0] sm:$0xff]
          %v1216 = vld [vmem:[#allocation2 + $0xd8] sm:$0xff]
          %v1217 = vld [vmem:[#allocation2 + $0xe0] sm:$0xff]
          %v1218 = vld [vmem:[#allocation2 + $0xe8] sm:$0xff]
          %v1219 = vld [vmem:[#allocation2 + $0xf0] sm:$0xff]
          %v1220 = vld [vmem:[#allocation2 + $0xf8] sm:$0xff]
          %v1221 = vld [vmem:[#allocation2 + $0x100] sm:$0xff]
          %v1222 = vld [vmem:[#allocation2 + $0x108] sm:$0xff]
          %v1223 = vld [vmem:[#allocation2 + $0x110] sm:$0xff]
          %v1224 = vld [vmem:[#allocation2 + $0x118] sm:$0xff]
          %v1225 = vld [vmem:[#allocation2 + $0x120] sm:$0xff]
          %v1226 = vld [vmem:[#allocation2 + $0x128] sm:$0xff]
          %v1227 = vld [vmem:[#allocation2 + $0x130] sm:$0xff]
          %v1228 = vld [vmem:[#allocation2 + $0x138] sm:$0xff]
          %v1229 = vld [vmem:[#allocation2 + $0x140] sm:$0xff]
          %v1230 = vld [vmem:[#allocation2 + $0x148] sm:$0xff]
          %v1231 = vld [vmem:[#allocation2 + $0x150] sm:$0xff]
          %v1232 = vld [vmem:[#allocation2 + $0x158] sm:$0xff]
          %v1233 = vld [vmem:[#allocation2 + $0x160] sm:$0xff]
          %v1234 = vld [vmem:[#allocation2 + $0x168] sm:$0xff]
          %v1235 = vld [vmem:[#allocation2 + $0x170] sm:$0xff]
          %v1236 = vld [vmem:[#allocation2 + $0x178] sm:$0xff]
          %v1237 = vld [vmem:[#allocation2 + $0x180] sm:$0xff]
          %v1238 = vld [vmem:[#allocation2 + $0x188] sm:$0xff]
          %v1239 = vld [vmem:[#allocation2 + $0x190] sm:$0xff]
          %v1240 = vld [vmem:[#allocation2 + $0x198] sm:$0xff]
          %v1241 = vld [vmem:[#allocation2 + $0x1a0] sm:$0xff]
          %v1242 = vld [vmem:[#allocation2 + $0x1a8] sm:$0xff]
          %v1243 = vld [vmem:[#allocation2 + $0x1b0] sm:$0xff]
          %v1244 = vld [vmem:[#allocation2 + $0x1b8] sm:$0xff]
          %v1245 = vld [vmem:[#allocation2 + $0x1c0] sm:$0xff]
          %v1246 = vld [vmem:[#allocation2 + $0x1c8] sm:$0xff]
          %v1247 = vld [vmem:[#allocation2 + $0x1d0] sm:$0xff]
          %v1248 = vld [vmem:[#allocation2 + $0x1d8] sm:$0xff]
          %v1249 = vld [vmem:[#allocation2 + $0x1e0] sm:$0xff]
          %v1250 = vld [vmem:[#allocation2 + $0x1e8] sm:$0xff]
          %v1251 = vld [vmem:[#allocation2 + $0x1f0] sm:$0xff]
          %v1252 = vld [vmem:[#allocation2 + $0x1f8] sm:$0xff]
          %v1253 = vld [vmem:[%s310] sm:$0x1]
          %v1255 = vlaneseq
          %v1256 = vshrl.u32 %v1255, 7
          %v1257 = vsub.s32 0, %v1256
          %v1258 = vrot.slane %v1253, %v1257
          %v1260 = vmul.f32 %v1189, %v1258
          %v1261 = vmul.f32 %v1190, %v1258
          %v1262 = vmul.f32 %v1191, %v1258
          %v1263 = vmul.f32 %v1192, %v1258
          %v1264 = vmul.f32 %v1193, %v1258
          %v1265 = vmul.f32 %v1194, %v1258
          %v1266 = vmul.f32 %v1195, %v1258
          %v1267 = vmul.f32 %v1196, %v1258
          %v1268 = vmul.f32 %v1197, %v1258
          %v1269 = vmul.f32 %v1198, %v1258
          %v1270 = vmul.f32 %v1199, %v1258
          %v1271 = vmul.f32 %v1200, %v1258
          %v1272 = vmul.f32 %v1201, %v1258
          %v1273 = vmul.f32 %v1202, %v1258
          %v1274 = vmul.f32 %v1203, %v1258
          %v1275 = vmul.f32 %v1204, %v1258
          %v1276 = vmul.f32 %v1205, %v1258
          %v1277 = vmul.f32 %v1206, %v1258
          %v1278 = vmul.f32 %v1207, %v1258
          %v1279 = vmul.f32 %v1208, %v1258
          %v1280 = vmul.f32 %v1209, %v1258
          %v1281 = vmul.f32 %v1210, %v1258
          %v1282 = vmul.f32 %v1211, %v1258
          %v1283 = vmul.f32 %v1212, %v1258
          %v1284 = vmul.f32 %v1213, %v1258
          %v1285 = vmul.f32 %v1214, %v1258
          %v1286 = vmul.f32 %v1215, %v1258
          %v1287 = vmul.f32 %v1216, %v1258
          %v1288 = vmul.f32 %v1217, %v1258
          %v1289 = vmul.f32 %v1218, %v1258
          %v1290 = vmul.f32 %v1219, %v1258
          %v1291 = vmul.f32 %v1220, %v1258
          %v1292 = vmul.f32 %v1221, %v1258
          %v1293 = vmul.f32 %v1222, %v1258
          %v1294 = vmul.f32 %v1223, %v1258
          %v1295 = vmul.f32 %v1224, %v1258
          %v1296 = vmul.f32 %v1225, %v1258
          %v1297 = vmul.f32 %v1226, %v1258
          %v1298 = vmul.f32 %v1227, %v1258
          %v1299 = vmul.f32 %v1228, %v1258
          %v1300 = vmul.f32 %v1229, %v1258
          %v1301 = vmul.f32 %v1230, %v1258
          %v1302 = vmul.f32 %v1231, %v1258
          %v1303 = vmul.f32 %v1232, %v1258
          %v1304 = vmul.f32 %v1233, %v1258
          %v1305 = vmul.f32 %v1234, %v1258
          %v1306 = vmul.f32 %v1235, %v1258
          %v1307 = vmul.f32 %v1236, %v1258
          %v1308 = vmul.f32 %v1237, %v1258
          %v1309 = vmul.f32 %v1238, %v1258
          %v1310 = vmul.f32 %v1239, %v1258
          %v1311 = vmul.f32 %v1240, %v1258
          %v1312 = vmul.f32 %v1241, %v1258
          %v1313 = vmul.f32 %v1242, %v1258
          %v1314 = vmul.f32 %v1243, %v1258
          %v1315 = vmul.f32 %v1244, %v1258
          %v1316 = vmul.f32 %v1245, %v1258
          %v1317 = vmul.f32 %v1246, %v1258
          %v1318 = vmul.f32 %v1247, %v1258
          %v1319 = vmul.f32 %v1248, %v1258
          %v1320 = vmul.f32 %v1249, %v1258
          %v1321 = vmul.f32 %v1250, %v1258
          %v1322 = vmul.f32 %v1251, %v1258
          %v1323 = vmul.f32 %v1252, %v1258
          %v1324 = vld [vmem:[%s313] sm:$0x1]
          %v1326 = vlaneseq
          %v1327 = vshrl.u32 %v1326, 7
          %v1328 = vsub.s32 0, %v1327
          %v1329 = vrot.slane %v1324, %v1328
          %v1331 = vadd.f32 %v1260, %v1329
          %v1332 = vadd.f32 %v1261, %v1329
          %v1333 = vadd.f32 %v1262, %v1329
          %v1334 = vadd.f32 %v1263, %v1329
          %v1335 = vadd.f32 %v1264, %v1329
          %v1336 = vadd.f32 %v1265, %v1329
          %v1337 = vadd.f32 %v1266, %v1329
          %v1338 = vadd.f32 %v1267, %v1329
          %v1339 = vadd.f32 %v1268, %v1329
          %v1340 = vadd.f32 %v1269, %v1329
          %v1341 = vadd.f32 %v1270, %v1329
          %v1342 = vadd.f32 %v1271, %v1329
          %v1343 = vadd.f32 %v1272, %v1329
          %v1344 = vadd.f32 %v1273, %v1329
          %v1345 = vadd.f32 %v1274, %v1329
          %v1346 = vadd.f32 %v1275, %v1329
          %v1347 = vadd.f32 %v1276, %v1329
          %v1348 = vadd.f32 %v1277, %v1329
          %v1349 = vadd.f32 %v1278, %v1329
          %v1350 = vadd.f32 %v1279, %v1329
          %v1351 = vadd.f32 %v1280, %v1329
          %v1352 = vadd.f32 %v1281, %v1329
          %v1353 = vadd.f32 %v1282, %v1329
          %v1354 = vadd.f32 %v1283, %v1329
          %v1355 = vadd.f32 %v1284, %v1329
          %v1356 = vadd.f32 %v1285, %v1329
          %v1357 = vadd.f32 %v1286, %v1329
          %v1358 = vadd.f32 %v1287, %v1329
          %v1359 = vadd.f32 %v1288, %v1329
          %v1360 = vadd.f32 %v1289, %v1329
          %v1361 = vadd.f32 %v1290, %v1329
          %v1362 = vadd.f32 %v1291, %v1329
          %v1363 = vadd.f32 %v1292, %v1329
          %v1364 = vadd.f32 %v1293, %v1329
          %v1365 = vadd.f32 %v1294, %v1329
          %v1366 = vadd.f32 %v1295, %v1329
          %v1367 = vadd.f32 %v1296, %v1329
          %v1368 = vadd.f32 %v1297, %v1329
          %v1369 = vadd.f32 %v1298, %v1329
          %v1370 = vadd.f32 %v1299, %v1329
          %v1371 = vadd.f32 %v1300, %v1329
          %v1372 = vadd.f32 %v1301, %v1329
          %v1373 = vadd.f32 %v1302, %v1329
          %v1374 = vadd.f32 %v1303, %v1329
          %v1375 = vadd.f32 %v1304, %v1329
          %v1376 = vadd.f32 %v1305, %v1329
          %v1377 = vadd.f32 %v1306, %v1329
          %v1378 = vadd.f32 %v1307, %v1329
          %v1379 = vadd.f32 %v1308, %v1329
          %v1380 = vadd.f32 %v1309, %v1329
          %v1381 = vadd.f32 %v1310, %v1329
          %v1382 = vadd.f32 %v1311, %v1329
          %v1383 = vadd.f32 %v1312, %v1329
          %v1384 = vadd.f32 %v1313, %v1329
          %v1385 = vadd.f32 %v1314, %v1329
          %v1386 = vadd.f32 %v1315, %v1329
          %v1387 = vadd.f32 %v1316, %v1329
          %v1388 = vadd.f32 %v1317, %v1329
          %v1389 = vadd.f32 %v1318, %v1329
          %v1390 = vadd.f32 %v1319, %v1329
          %v1391 = vadd.f32 %v1320, %v1329
          %v1392 = vadd.f32 %v1321, %v1329
          %v1393 = vadd.f32 %v1322, %v1329
          %v1394 = vadd.f32 %v1323, %v1329
          %v1395 = vmax.f32 %v1331, 0.0
          %v1396 = vmax.f32 %v1332, 0.0
          %v1397 = vmax.f32 %v1333, 0.0
          %v1398 = vmax.f32 %v1334, 0.0
          %v1399 = vmax.f32 %v1335, 0.0
          %v1400 = vmax.f32 %v1336, 0.0
          %v1401 = vmax.f32 %v1337, 0.0
          %v1402 = vmax.f32 %v1338, 0.0
          %v1403 = vmax.f32 %v1339, 0.0
          %v1404 = vmax.f32 %v1340, 0.0
          %v1405 = vmax.f32 %v1341, 0.0
          %v1406 = vmax.f32 %v1342, 0.0
          %v1407 = vmax.f32 %v1343, 0.0
          %v1408 = vmax.f32 %v1344, 0.0
          %v1409 = vmax.f32 %v1345, 0.0
          %v1410 = vmax.f32 %v1346, 0.0
          %v1411 = vmax.f32 %v1347, 0.0
          %v1412 = vmax.f32 %v1348, 0.0
          %v1413 = vmax.f32 %v1349, 0.0
          %v1414 = vmax.f32 %v1350, 0.0
          %v1415 = vmax.f32 %v1351, 0.0
          %v1416 = vmax.f32 %v1352, 0.0
          %v1417 = vmax.f32 %v1353, 0.0
          %v1418 = vmax.f32 %v1354, 0.0
          %v1419 = vmax.f32 %v1355, 0.0
          %v1420 = vmax.f32 %v1356, 0.0
          %v1421 = vmax.f32 %v1357, 0.0
          %v1422 = vmax.f32 %v1358, 0.0
          %v1423 = vmax.f32 %v1359, 0.0
          %v1424 = vmax.f32 %v1360, 0.0
          %v1425 = vmax.f32 %v1361, 0.0
          %v1426 = vmax.f32 %v1362, 0.0
          %v1427 = vmax.f32 %v1363, 0.0
          %v1428 = vmax.f32 %v1364, 0.0
          %v1429 = vmax.f32 %v1365, 0.0
          %v1430 = vmax.f32 %v1366, 0.0
          %v1431 = vmax.f32 %v1367, 0.0
          %v1432 = vmax.f32 %v1368, 0.0
          %v1433 = vmax.f32 %v1369, 0.0
          %v1434 = vmax.f32 %v1370, 0.0
          %v1435 = vmax.f32 %v1371, 0.0
          %v1436 = vmax.f32 %v1372, 0.0
          %v1437 = vmax.f32 %v1373, 0.0
          %v1438 = vmax.f32 %v1374, 0.0
          %v1439 = vmax.f32 %v1375, 0.0
          %v1440 = vmax.f32 %v1376, 0.0
          %v1441 = vmax.f32 %v1377, 0.0
          %v1442 = vmax.f32 %v1378, 0.0
          %v1443 = vmax.f32 %v1379, 0.0
          %v1444 = vmax.f32 %v1380, 0.0
          %v1445 = vmax.f32 %v1381, 0.0
          %v1446 = vmax.f32 %v1382, 0.0
          %v1447 = vmax.f32 %v1383, 0.0
          %v1448 = vmax.f32 %v1384, 0.0
          %v1449 = vmax.f32 %v1385, 0.0
          %v1450 = vmax.f32 %v1386, 0.0
          %v1451 = vmax.f32 %v1387, 0.0
          %v1452 = vmax.f32 %v1388, 0.0
          %v1453 = vmax.f32 %v1389, 0.0
          %v1454 = vmax.f32 %v1390, 0.0
          %v1455 = vmax.f32 %v1391, 0.0
          %v1456 = vmax.f32 %v1392, 0.0
          %v1457 = vmax.f32 %v1393, 0.0
          %v1458 = vmax.f32 %v1394, 0.0
          %v1459 = vpack.c.bf16 %v1396, %v1395
          %v1460 = vpack.c.bf16 %v1398, %v1397
          %v1461 = vpack.c.bf16 %v1400, %v1399
          %v1462 = vpack.c.bf16 %v1402, %v1401
          %v1463 = vpack.c.bf16 %v1404, %v1403
          %v1464 = vpack.c.bf16 %v1406, %v1405
          %v1465 = vpack.c.bf16 %v1408, %v1407
          %v1466 = vpack.c.bf16 %v1410, %v1409
          %v1467 = vpack.c.bf16 %v1412, %v1411
          %v1468 = vpack.c.bf16 %v1414, %v1413
          %v1469 = vpack.c.bf16 %v1416, %v1415
          %v1470 = vpack.c.bf16 %v1418, %v1417
          %v1471 = vpack.c.bf16 %v1420, %v1419
          %v1472 = vpack.c.bf16 %v1422, %v1421
          %v1473 = vpack.c.bf16 %v1424, %v1423
          %v1474 = vpack.c.bf16 %v1426, %v1425
          %v1475 = vpack.c.bf16 %v1428, %v1427
          %v1476 = vpack.c.bf16 %v1430, %v1429
          %v1477 = vpack.c.bf16 %v1432, %v1431
          %v1478 = vpack.c.bf16 %v1434, %v1433
          %v1479 = vpack.c.bf16 %v1436, %v1435
          %v1480 = vpack.c.bf16 %v1438, %v1437
          %v1481 = vpack.c.bf16 %v1440, %v1439
          %v1482 = vpack.c.bf16 %v1442, %v1441
          %v1483 = vpack.c.bf16 %v1444, %v1443
          %v1484 = vpack.c.bf16 %v1446, %v1445
          %v1485 = vpack.c.bf16 %v1448, %v1447
          %v1486 = vpack.c.bf16 %v1450, %v1449
          %v1487 = vpack.c.bf16 %v1452, %v1451
          %v1488 = vpack.c.bf16 %v1454, %v1453
          %v1489 = vpack.c.bf16 %v1456, %v1455
          %v1490 = vpack.c.bf16 %v1458, %v1457
          %v1523 = vunpack.c.l.b16 %v1459
          %v1524 = vunpack.c.h.b16 %v1459
          %v1525 = vunpack.c.l.b16 %v1460
          %v1526 = vunpack.c.h.b16 %v1460
          %v1527 = vunpack.c.l.b16 %v1461
          %v1528 = vunpack.c.h.b16 %v1461
          %v1529 = vunpack.c.l.b16 %v1462
          %v1530 = vunpack.c.h.b16 %v1462
          %v1531 = vunpack.c.l.b16 %v1463
          %v1532 = vunpack.c.h.b16 %v1463
          %v1533 = vunpack.c.l.b16 %v1464
          %v1534 = vunpack.c.h.b16 %v1464
          %v1535 = vunpack.c.l.b16 %v1465
          %v1536 = vunpack.c.h.b16 %v1465
          %v1537 = vunpack.c.l.b16 %v1466
          %v1538 = vunpack.c.h.b16 %v1466
          %v1539 = vunpack.c.l.b16 %v1467
          %v1540 = vunpack.c.h.b16 %v1467
          %v1541 = vunpack.c.l.b16 %v1468
          %v1542 = vunpack.c.h.b16 %v1468
          %v1543 = vunpack.c.l.b16 %v1469
          %v1544 = vunpack.c.h.b16 %v1469
          %v1545 = vunpack.c.l.b16 %v1470
          %v1546 = vunpack.c.h.b16 %v1470
          %v1547 = vunpack.c.l.b16 %v1471
          %v1548 = vunpack.c.h.b16 %v1471
          %v1549 = vunpack.c.l.b16 %v1472
          %v1550 = vunpack.c.h.b16 %v1472
          %v1551 = vunpack.c.l.b16 %v1473
          %v1552 = vunpack.c.h.b16 %v1473
          %v1553 = vunpack.c.l.b16 %v1474
          %v1554 = vunpack.c.h.b16 %v1474
          %v1555 = vunpack.c.l.b16 %v1475
          %v1556 = vunpack.c.h.b16 %v1475
          %v1557 = vunpack.c.l.b16 %v1476
          %v1558 = vunpack.c.h.b16 %v1476
          %v1559 = vunpack.c.l.b16 %v1477
          %v1560 = vunpack.c.h.b16 %v1477
          %v1561 = vunpack.c.l.b16 %v1478
          %v1562 = vunpack.c.h.b16 %v1478
          %v1563 = vunpack.c.l.b16 %v1479
          %v1564 = vunpack.c.h.b16 %v1479
          %v1565 = vunpack.c.l.b16 %v1480
          %v1566 = vunpack.c.h.b16 %v1480
          %v1567 = vunpack.c.l.b16 %v1481
          %v1568 = vunpack.c.h.b16 %v1481
          %v1569 = vunpack.c.l.b16 %v1482
          %v1570 = vunpack.c.h.b16 %v1482
          %v1571 = vunpack.c.l.b16 %v1483
          %v1572 = vunpack.c.h.b16 %v1483
          %v1573 = vunpack.c.l.b16 %v1484
          %v1574 = vunpack.c.h.b16 %v1484
          %v1575 = vunpack.c.l.b16 %v1485
          %v1576 = vunpack.c.h.b16 %v1485
          %v1577 = vunpack.c.l.b16 %v1486
          %v1578 = vunpack.c.h.b16 %v1486
          %v1579 = vunpack.c.l.b16 %v1487
          %v1580 = vunpack.c.h.b16 %v1487
          %v1581 = vunpack.c.l.b16 %v1488
          %v1582 = vunpack.c.h.b16 %v1488
          %v1583 = vunpack.c.l.b16 %v1489
          %v1584 = vunpack.c.h.b16 %v1489
          %v1585 = vunpack.c.l.b16 %v1490
          %v1586 = vunpack.c.h.b16 %v1490
          %v1587 = vpack.c.b16 %v1523, %v1523
          %v1588 = vpack.c.b16 %v1524, %v1524
          %v1589 = vpack.c.b16 %v1525, %v1525
          %v1590 = vpack.c.b16 %v1526, %v1526
          %v1591 = vpack.c.b16 %v1527, %v1527
          %v1592 = vpack.c.b16 %v1528, %v1528
          %v1593 = vpack.c.b16 %v1529, %v1529
          %v1594 = vpack.c.b16 %v1530, %v1530
          %v1595 = vpack.c.b16 %v1531, %v1531
          %v1596 = vpack.c.b16 %v1532, %v1532
          %v1597 = vpack.c.b16 %v1533, %v1533
          %v1598 = vpack.c.b16 %v1534, %v1534
          %v1599 = vpack.c.b16 %v1535, %v1535
          %v1600 = vpack.c.b16 %v1536, %v1536
          %v1601 = vpack.c.b16 %v1537, %v1537
          %v1602 = vpack.c.b16 %v1538, %v1538
          %v1603 = vpack.c.b16 %v1539, %v1539
          %v1604 = vpack.c.b16 %v1540, %v1540
          %v1605 = vpack.c.b16 %v1541, %v1541
          %v1606 = vpack.c.b16 %v1542, %v1542
          %v1607 = vpack.c.b16 %v1543, %v1543
          %v1608 = vpack.c.b16 %v1544, %v1544
          %v1609 = vpack.c.b16 %v1545, %v1545
          %v1610 = vpack.c.b16 %v1546, %v1546
          %v1611 = vpack.c.b16 %v1547, %v1547
          %v1612 = vpack.c.b16 %v1548, %v1548
          %v1613 = vpack.c.b16 %v1549, %v1549
          %v1614 = vpack.c.b16 %v1550, %v1550
          %v1615 = vpack.c.b16 %v1551, %v1551
          %v1616 = vpack.c.b16 %v1552, %v1552
          %v1617 = vpack.c.b16 %v1553, %v1553
          %v1618 = vpack.c.b16 %v1554, %v1554
          %v1619 = vpack.c.b16 %v1555, %v1555
          %v1620 = vpack.c.b16 %v1556, %v1556
          %v1621 = vpack.c.b16 %v1557, %v1557
          %v1622 = vpack.c.b16 %v1558, %v1558
          %v1623 = vpack.c.b16 %v1559, %v1559
          %v1624 = vpack.c.b16 %v1560, %v1560
          %v1625 = vpack.c.b16 %v1561, %v1561
          %v1626 = vpack.c.b16 %v1562, %v1562
          %v1627 = vpack.c.b16 %v1563, %v1563
          %v1628 = vpack.c.b16 %v1564, %v1564
          %v1629 = vpack.c.b16 %v1565, %v1565
          %v1630 = vpack.c.b16 %v1566, %v1566
          %v1631 = vpack.c.b16 %v1567, %v1567
          %v1632 = vpack.c.b16 %v1568, %v1568
          %v1633 = vpack.c.b16 %v1569, %v1569
          %v1634 = vpack.c.b16 %v1570, %v1570
          %v1635 = vpack.c.b16 %v1571, %v1571
          %v1636 = vpack.c.b16 %v1572, %v1572
          %v1637 = vpack.c.b16 %v1573, %v1573
          %v1638 = vpack.c.b16 %v1574, %v1574
          %v1639 = vpack.c.b16 %v1575, %v1575
          %v1640 = vpack.c.b16 %v1576, %v1576
          %v1641 = vpack.c.b16 %v1577, %v1577
          %v1642 = vpack.c.b16 %v1578, %v1578
          %v1643 = vpack.c.b16 %v1579, %v1579
          %v1644 = vpack.c.b16 %v1580, %v1580
          %v1645 = vpack.c.b16 %v1581, %v1581
          %v1646 = vpack.c.b16 %v1582, %v1582
          %v1647 = vpack.c.b16 %v1583, %v1583
          %v1648 = vpack.c.b16 %v1584, %v1584
          %v1649 = vpack.c.b16 %v1585, %v1585
          %v1650 = vpack.c.b16 %v1586, %v1586
          %1715 = vst [vmem:[%s305] sm:$0xf] %v1587
          %1716 = vst [vmem:[%s305 + $0x4] sm:$0xf] %v1588
          %1717 = vst [vmem:[%s305 + $0x8] sm:$0xf] %v1589
          %1718 = vst [vmem:[%s305 + $0xc] sm:$0xf] %v1590
          %1719 = vst [vmem:[%s305 + $0x10] sm:$0xf] %v1591
          %1720 = vst [vmem:[%s305 + $0x14] sm:$0xf] %v1592
          %1721 = vst [vmem:[%s305 + $0x18] sm:$0xf] %v1593
          %1722 = vst [vmem:[%s305 + $0x1c] sm:$0xf] %v1594
          %1723 = vst [vmem:[%s305 + $0x20] sm:$0xf] %v1595
          %1724 = vst [vmem:[%s305 + $0x24] sm:$0xf] %v1596
          %1725 = vst [vmem:[%s305 + $0x28] sm:$0xf] %v1597
          %1726 = vst [vmem:[%s305 + $0x2c] sm:$0xf] %v1598
          %1727 = vst [vmem:[%s305 + $0x30] sm:$0xf] %v1599
          %1728 = vst [vmem:[%s305 + $0x34] sm:$0xf] %v1600
          %1729 = vst [vmem:[%s305 + $0x38] sm:$0xf] %v1601
          %1730 = vst [vmem:[%s305 + $0x3c] sm:$0xf] %v1602
          %1731 = vst [vmem:[%s305 + $0x40] sm:$0xf] %v1603
          %1732 = vst [vmem:[%s305 + $0x44] sm:$0xf] %v1604
          %1733 = vst [vmem:[%s305 + $0x48] sm:$0xf] %v1605
          %1734 = vst [vmem:[%s305 + $0x4c] sm:$0xf] %v1606
          %1735 = vst [vmem:[%s305 + $0x50] sm:$0xf] %v1607
          %1736 = vst [vmem:[%s305 + $0x54] sm:$0xf] %v1608
          %1737 = vst [vmem:[%s305 + $0x58] sm:$0xf] %v1609
          %1738 = vst [vmem:[%s305 + $0x5c] sm:$0xf] %v1610
          %1739 = vst [vmem:[%s305 + $0x60] sm:$0xf] %v1611
          %1740 = vst [vmem:[%s305 + $0x64] sm:$0xf] %v1612
          %1741 = vst [vmem:[%s305 + $0x68] sm:$0xf] %v1613
          %1742 = vst [vmem:[%s305 + $0x6c] sm:$0xf] %v1614
          %1743 = vst [vmem:[%s305 + $0x70] sm:$0xf] %v1615
          %1744 = vst [vmem:[%s305 + $0x74] sm:$0xf] %v1616
          %1745 = vst [vmem:[%s305 + $0x78] sm:$0xf] %v1617
          %1746 = vst [vmem:[%s305 + $0x7c] sm:$0xf] %v1618
          %1747 = vst [vmem:[%s305 + $0x80] sm:$0xf] %v1619
          %1748 = vst [vmem:[%s305 + $0x84] sm:$0xf] %v1620
          %1749 = vst [vmem:[%s305 + $0x88] sm:$0xf] %v1621
          %1750 = vst [vmem:[%s305 + $0x8c] sm:$0xf] %v1622
          %1751 = vst [vmem:[%s305 + $0x90] sm:$0xf] %v1623
          %1752 = vst [vmem:[%s305 + $0x94] sm:$0xf] %v1624
          %1753 = vst [vmem:[%s305 + $0x98] sm:$0xf] %v1625
          %1754 = vst [vmem:[%s305 + $0x9c] sm:$0xf] %v1626
          %1755 = vst [vmem:[%s305 + $0xa0] sm:$0xf] %v1627
          %1756 = vst [vmem:[%s305 + $0xa4] sm:$0xf] %v1628
          %1757 = vst [vmem:[%s305 + $0xa8] sm:$0xf] %v1629
          %1758 = vst [vmem:[%s305 + $0xac] sm:$0xf] %v1630
          %1759 = vst [vmem:[%s305 + $0xb0] sm:$0xf] %v1631
          %1760 = vst [vmem:[%s305 + $0xb4] sm:$0xf] %v1632
          %1761 = vst [vmem:[%s305 + $0xb8] sm:$0xf] %v1633
          %1762 = vst [vmem:[%s305 + $0xbc] sm:$0xf] %v1634
          %1763 = vst [vmem:[%s305 + $0xc0] sm:$0xf] %v1635
          %1764 = vst [vmem:[%s305 + $0xc4] sm:$0xf] %v1636
          %1765 = vst [vmem:[%s305 + $0xc8] sm:$0xf] %v1637
          %1766 = vst [vmem:[%s305 + $0xcc] sm:$0xf] %v1638
          %1767 = vst [vmem:[%s305 + $0xd0] sm:$0xf] %v1639
          %1768 = vst [vmem:[%s305 + $0xd4] sm:$0xf] %v1640
          %1769 = vst [vmem:[%s305 + $0xd8] sm:$0xf] %v1641
          %1770 = vst [vmem:[%s305 + $0xdc] sm:$0xf] %v1642
          %1771 = vst [vmem:[%s305 + $0xe0] sm:$0xf] %v1643
          %1772 = vst [vmem:[%s305 + $0xe4] sm:$0xf] %v1644
          %1773 = vst [vmem:[%s305 + $0xe8] sm:$0xf] %v1645
          %1774 = vst [vmem:[%s305 + $0xec] sm:$0xf] %v1646
          %1775 = vst [vmem:[%s305 + $0xf0] sm:$0xf] %v1647
          %1776 = vst [vmem:[%s305 + $0xf4] sm:$0xf] %v1648
          %1777 = vst [vmem:[%s305 + $0xf8] sm:$0xf] %v1649
          %1778 = vst [vmem:[%s305 + $0xfc] sm:$0xf] %v1650
        $region52: #{tpu_custom_call.1} parent=35 // pred_fallthru
          _
        %s1779 = sand.u32 %s161, 1
        %s1780 = scalar_lea.sflag [#allocation5], %s1779
        %s1781 = sand.u32 %s161, 1
        %s1782 = smul.addr %s1781, 256
        %s1783 = scalar_lea.vmem [#allocation8], %s1782
        // Predicated region
        $region53: #{tpu_custom_call.1} parent=35 // pred_check
          %p1784 = pneg %p171
        $region54: #{tpu_custom_call.1} parent=35 // pred_check_branch
          %1786 = sbr.rel (%p1784) target = $region56
        $region55: #{tpu_custom_call.1} parent=35 // pred_region
          %s1787 = smul.u32 64, %s29
          %s1789 = ssub.s32 4096, 4096
          %1790 = vsyncadd %s1780, %s1789
          %s1791 = sadd.s32 %s30, %s1787
          %s1792 = smul.addr %s1791, 64
          %s1793 = scalar_lea.hbm %s4, %s1792
          %s1794 = sshll.u32 %s1783, 4
          %s1795 = int_to_ptr.vmem [resolvable:$true] %s1794
          %1800 = dma.vmem_to_hbm [thread:$0]  %s1795, 4096, %s1793, %s1780, 64, 64, 4
        $region56: #{tpu_custom_call.1} parent=35 // pred_fallthru
          _
      $region36: #{tpu_custom_call.1} parent=5 // pred_fallthru
        _
      %p1801 = scmp.le.s32.totalorder 2, %s19
      // Predicated region
      $region57: #{tpu_custom_call.1} parent=5 // pred_check
        %p1802 = pneg %p1801
      $region58: #{tpu_custom_call.1} parent=5 // pred_check_branch
        %1804 = sbr.rel (%p1802) target = $region60
      $region59: #{tpu_custom_call.1} parent=5 // pred_region
        %s1805 = ssub.s32 %s19, 2
        // Predicated region
        $region61: #{tpu_custom_call.1} parent=59 // pred_check
          %p1806 = pneg %p177
        $region62: #{tpu_custom_call.1} parent=59 // pred_check_branch
          %1808 = sbr.rel (%p1806) target = $region64
        $region63: #{tpu_custom_call.1} parent=59 // pred_region
          %s1809 = sand.u32 %s162, 1
          %s1810 = scalar_lea.sflag [#allocation5], %s1809
          %s1811 = sand.u32 %s162, 1
          %s1812 = smul.addr %s1811, 256
          %s1813 = scalar_lea.vmem [#allocation8], %s1812
          %1814 = dma.done %s1810, 4096
        $region64: #{tpu_custom_call.1} parent=59 // pred_fallthru
          _
      $region60: #{tpu_custom_call.1} parent=5 // pred_fallthru
        _
    $region6: #{tpu_custom_call.1} parent=1 // loop_footer
      %s23 = sadd.s32 1, %s19
    $region7: #{tpu_custom_call.1} parent=1 // loop_footer_branch
      %18 = sbr.rel target = $region3
    $region8: #{tpu_custom_call.1} parent=1 // loop_exit
      _
    %1815 = vsyncpa [#allocation4], 1
    %s1816 = scalar_lea.sflag [#allocation4], 1
    %1817 = vsyncpa %s1816, 1
    %1818 = vsyncpa [#allocation7], 1
    %s1819 = scalar_lea.sflag [#allocation7], 1
    %1820 = vsyncpa %s1819, 1
    %1821 = vsyncpa [#allocation5], 1
    %s1822 = scalar_lea.sflag [#allocation5], 1
    %1823 = vsyncpa %s1822, 1

</llo_original>
